<compile_context>
chip_gen: v7x
topology: tpu7x:2x2x1
jax: 0.10.0
libtpu: 0.0.40
codegen_flags: <defaults>
</compile_context>

<pallas_src>
import functools
import math

import jax
import jax.numpy as jnp
from jax import lax
from jax.experimental import pallas as pl
from jax.experimental.pallas import tpu as pltpu


_MIB = 1024 * 1024


def _cparams(buffered_bytes, resident_bytes=0, n_grid_axes=1):
    """Parallel batch grid + VMEM limit from the real resident set:
    double-buffered pipeline tiles (x2) + single-copy in-kernel intermediates
    + 8 MiB compiler headroom, clamped to [32 MiB, 56 MiB] (v7x-safe)."""
    limit = int(2 * buffered_bytes + resident_bytes + 8 * _MIB)
    limit = min(max(limit, 32 * _MIB), 56 * _MIB)
    return pltpu.CompilerParams(
        dimension_semantics=("parallel",) * n_grid_axes,
        vmem_limit_bytes=limit)


# ---------------------------------------------------------------------------
# Kernel 1: patch-embed matmul (+ bias + patch positional embedding)
#           row 0 of the output is written with (cls_token + pos_cls).
# ---------------------------------------------------------------------------
def _patch_embed_kernel(x_ref, w_ref, b_ref, pos_ref, cls_ref, o_ref):
    x = x_ref[0]                                             # (nP, K) bf16
    y = jnp.dot(x, w_ref[...], preferred_element_type=jnp.float32)
    o_ref[0, 0:1, :] = cls_ref[...]                          # cls + pos_cls
    o_ref[0, 1:, :] = y + b_ref[...] + pos_ref[0]            # patches


def patch_embed(xp_bf16, w_t, b, pos_patch, cls_full):
    B, nP, K = xp_bf16.shape
    D = w_t.shape[1]
    N = nP + 1
    buffered = (2 * nP * K + 2 * K * D + 4 * D + 4 * nP * D + 4 * D
                + 4 * N * D)
    resident = 4 * nP * D
    return pl.pallas_call(
        _patch_embed_kernel,
        out_shape=jax.ShapeDtypeStruct((B, N, D), jnp.float32),
        grid=(B,),
        in_specs=[
            pl.BlockSpec((1, nP, K), lambda i: (i, 0, 0)),
            pl.BlockSpec((K, D), lambda i: (0, 0)),
            pl.BlockSpec((1, D), lambda i: (0, 0)),
            pl.BlockSpec((1, nP, D), lambda i: (0, 0, 0)),
            pl.BlockSpec((1, D), lambda i: (0, 0)),
        ],
        out_specs=pl.BlockSpec((1, N, D), lambda i: (i, 0, 0)),
        compiler_params=_cparams(buffered, resident),
    )(xp_bf16, w_t, b, pos_patch, cls_full)


# ---------------------------------------------------------------------------
# Kernel 2: fused transformer block
#   LN1 -> qkv (LoRA pre-folded) -> all-head softmax attention -> out proj
#   -> +residual -> LN2 -> fc1 -> GELU(erf) -> fc2 -> +residual
# ---------------------------------------------------------------------------
def _encoder_block_kernel(tok_ref, g1_ref, b1_ref, wqkv_ref, bqkv_ref,
                          wproj_ref, bproj_ref, g2_ref, b2_ref,
                          w1_ref, bfc1_ref, w2_ref, bfc2_ref,
                          o_ref, attn_scr, *, nh, hd, scale, eps):
    x = tok_ref[0]                                           # (N, D) f32 residual
    D = nh * hd

    # ---- LayerNorm 1 (f32 statistics) ----
    mu = jnp.mean(x, axis=-1, keepdims=True)
    var = jnp.mean((x - mu) ** 2, axis=-1, keepdims=True)
    xn = (x - mu) * lax.rsqrt(var + eps) * g1_ref[...] + b1_ref[...]
    xb = xn.astype(jnp.bfloat16)

    # ---- qkv projection (LoRA already folded into the weight) ----
    qkv = jnp.dot(xb, wqkv_ref[...],
                  preferred_element_type=jnp.float32) + bqkv_ref[...]
    qs = (qkv[:, :D] * scale).astype(jnp.bfloat16)
    kb = qkv[:, D:2 * D].astype(jnp.bfloat16)
    vb = qkv[:, 2 * D:].astype(jnp.bfloat16)

    # ---- all-head attention, normalisation after PV ----
    for h in range(nh):
        lo, hi = h * hd, (h + 1) * hd
        s = lax.dot_general(qs[:, lo:hi], kb[:, lo:hi],
                            (((1,), (1,)), ((), ())),
                            preferred_element_type=jnp.float32)   # (N, N)
        s = s - jnp.max(s, axis=-1, keepdims=True)
        p = jnp.exp(s)
        l = jnp.sum(p, axis=-1, keepdims=True)                    # (N, 1)
        pv = jnp.dot(p.astype(jnp.bfloat16), vb[:, lo:hi],
                     preferred_element_type=jnp.float32)          # (N, hd)
        attn_scr[:, lo:hi] = (pv * pl.reciprocal(l, approx=True)
                              ).astype(jnp.bfloat16)

    # ---- output projection + residual ----
    r1 = (x
          + jnp.dot(attn_scr[...], wproj_ref[...],
                    preferred_element_type=jnp.float32)
          + bproj_ref[...])                                       # (N, D) f32

    # ---- LayerNorm 2 + MLP ----
    mu2 = jnp.mean(r1, axis=-1, keepdims=True)
    var2 = jnp.mean((r1 - mu2) ** 2, axis=-1, keepdims=True)
    yn = (r1 - mu2) * lax.rsqrt(var2 + eps) * g2_ref[...] + b2_ref[...]
    hid = jnp.dot(yn.astype(jnp.bfloat16), w1_ref[...],
                  preferred_element_type=jnp.float32) + bfc1_ref[...]
    # exact GELU (erf), matching timm's default nn.GELU
    hid = 0.5 * hid * (1.0 + lax.erf(hid * (1.0 / math.sqrt(2.0))))
    o_ref[0] = (r1
                + jnp.dot(hid.astype(jnp.bfloat16), w2_ref[...],
                          preferred_element_type=jnp.float32)
                + bfc2_ref[...])


def encoder_block(tokens, blk, nh, eps=1e-6):
    B, N, D = tokens.shape
    Hd = blk["fc1_w_t"].shape[1]
    hd = D // nh
    scale = hd ** -0.5
    buffered = (2 * 4 * N * D                          # tokens in + out (f32)
                + 2 * D * 3 * D + 2 * D * D            # qkv + proj weights (bf16)
                + 2 * D * Hd + 2 * Hd * D              # fc1 + fc2 weights (bf16)
                + 4 * (3 * D + 6 * D + Hd + D))        # biases / LN params (f32)
    resident = (4 * N * 3 * D                          # f32 qkv
                + 4 * N * N                            # per-head scores
                + 4 * N * Hd                           # f32 MLP hidden
                + 2 * N * D)                           # bf16 attn scratch
    kern = functools.partial(_encoder_block_kernel, nh=nh, hd=hd,
                             scale=scale, eps=eps)
    return pl.pallas_call(
        kern,
        out_shape=jax.ShapeDtypeStruct((B, N, D), jnp.float32),
        grid=(B,),
        in_specs=[
            pl.BlockSpec((1, N, D), lambda i: (i, 0, 0)),   # tokens
            pl.BlockSpec((1, D), lambda i: (0, 0)),         # ln1_g
            pl.BlockSpec((1, D), lambda i: (0, 0)),         # ln1_b
            pl.BlockSpec((D, 3 * D), lambda i: (0, 0)),     # qkv_w_t (LoRA folded)
            pl.BlockSpec((1, 3 * D), lambda i: (0, 0)),     # qkv_b
            pl.BlockSpec((D, D), lambda i: (0, 0)),         # proj_w_t
            pl.BlockSpec((1, D), lambda i: (0, 0)),         # proj_b
            pl.BlockSpec((1, D), lambda i: (0, 0)),         # ln2_g
            pl.BlockSpec((1, D), lambda i: (0, 0)),         # ln2_b
            pl.BlockSpec((D, Hd), lambda i: (0, 0)),        # fc1_w_t
            pl.BlockSpec((1, Hd), lambda i: (0, 0)),        # fc1_b
            pl.BlockSpec((Hd, D), lambda i: (0, 0)),        # fc2_w_t
            pl.BlockSpec((1, D), lambda i: (0, 0)),         # fc2_b
        ],
        out_specs=pl.BlockSpec((1, N, D), lambda i: (i, 0, 0)),
        scratch_shapes=[pltpu.VMEM((N, D), jnp.bfloat16)],
        compiler_params=_cparams(buffered, resident),
    )(tokens, blk["ln1_g"], blk["ln1_b"], blk["qkv_w_t"], blk["qkv_b"],
      blk["proj_w_t"], blk["proj_b"], blk["ln2_g"], blk["ln2_b"],
      blk["fc1_w_t"], blk["fc1_b"], blk["fc2_w_t"], blk["fc2_b"])


# ---------------------------------------------------------------------------
# Kernel 3: final LayerNorm on the pooled cls token (single invocation)
# ---------------------------------------------------------------------------
def _final_ln_kernel(x_ref, g_ref, b_ref, o_ref, *, eps):
    x = x_ref[...]                                           # (B, 1, D)
    mu = jnp.mean(x, axis=-1, keepdims=True)
    var = jnp.mean((x - mu) ** 2, axis=-1, keepdims=True)
    o_ref[...] = (x - mu) * lax.rsqrt(var + eps) * g_ref[...] + b_ref[...]


def layernorm_cls(x, gamma, beta, eps=1e-6):
    return pl.pallas_call(
        functools.partial(_final_ln_kernel, eps=eps),
        out_shape=jax.ShapeDtypeStruct(x.shape, jnp.float32),
    )(x, gamma, beta)


# ---------------------------------------------------------------------------
# Forward pass (CLIBDImageEncoder = LoRA-wrapped timm VisionTransformer)
# ---------------------------------------------------------------------------
def clibd_image_encoder_forward(x_nchw, params, cfg):
    """x_nchw: (B, C_in, H, W) f32.  Returns (B, embed_dim) cls features
    (num_classes=0 -> head is Identity, global_pool='token')."""
    B = x_nchw.shape[0]
    p = cfg["patch"]
    C_in, H, W = cfg["in_chans"], cfg["img"], cfg["img"]
    nh = cfg["heads"]

    # patch-embed conv (kernel=stride=patch) as im2col; cast to bf16 once.
    xp = x_nchw.reshape(B, C_in, H // p, p, W // p, p)
    xp = xp.transpose(0, 2, 4, 1, 3, 5).reshape(
        B, (H // p) * (W // p), C_in * p * p).astype(jnp.bfloat16)

    # patch embed + pos embed; row 0 = cls_token + pos_cls (no JAX-side concat)
    tokens = patch_embed(xp, params["patch_w_t"], params["patch_b"],
                         params["pos_patch"], params["cls_full"])   # (B, N, D)

    for blk in params["blocks"]:
        tokens = encoder_block(tokens, blk, nh)   # fused attn + MLP per layer

    # LayerNorm is per-token, so norm only the pooled cls token.
    cls_tok = layernorm_cls(tokens[:, 0:1, :], params["norm_g"], params["norm_b"])
    return cls_tok[:, 0]


# ---------------------------------------------------------------------------
# Parameter init (PyTorch layout, f32) + one-time prep (fold LoRA, transpose,
# bf16-cast the big matmul weights)
# ---------------------------------------------------------------------------
def init_params(key, cfg, r):
    C_in, p, D = cfg["in_chans"], cfg["patch"], cfg["embed_dim"]
    depth, Hd = cfg["depth"], cfg["embed_dim"] * cfg["mlp_ratio"]
    nP = (cfg["img"] // p) ** 2

    def nrm(k, shape, s=0.02):
        return s * jax.random.normal(k, shape, dtype=jnp.float32)

    keys = jax.random.split(key, 4 + depth)
    params = {
        "patch_w": nrm(keys[0], (D, C_in * p * p)),
        "patch_b": jnp.zeros((D,), jnp.float32),
        "cls_token": nrm(keys[1], (1, 1, D)),
        "pos_embed": nrm(keys[2], (1, nP + 1, D)),
        "norm_g": jnp.ones((D,), jnp.float32),
        "norm_b": jnp.zeros((D,), jnp.float32),
        "blocks": [],
    }
    for li in range(depth):
        bk = jax.random.split(keys[4 + li], 8)
        # LoRA A: kaiming_uniform_(a=sqrt(5)) -> U(-1/sqrt(fan_in), 1/sqrt(fan_in))
        bound = 1.0 / math.sqrt(D)
        blk = {
            "ln1_g": jnp.ones((D,), jnp.float32),
            "ln1_b": jnp.zeros((D,), jnp.float32),
            "qkv_w": nrm(bk[0], (3 * D, D)),
            "qkv_b": jnp.zeros((3 * D,), jnp.float32),
            "lora_aq": jax.random.uniform(bk[1], (r, D), jnp.float32, -bound, bound),
            "lora_bq": jnp.zeros((D, r), jnp.float32),   # nn.init.zeros_
            "lora_av": jax.random.uniform(bk[2], (r, D), jnp.float32, -bound, bound),
            "lora_bv": jnp.zeros((D, r), jnp.float32),   # nn.init.zeros_
            "proj_w": nrm(bk[3], (D, D)),
            "proj_b": jnp.zeros((D,), jnp.float32),
            "ln2_g": jnp.ones((D,), jnp.float32),
            "ln2_b": jnp.zeros((D,), jnp.float32),
            "fc1_w": nrm(bk[4], (Hd, D)),
            "fc1_b": jnp.zeros((Hd,), jnp.float32),
            "fc2_w": nrm(bk[5], (D, Hd)),
            "fc2_b": jnp.zeros((D,), jnp.float32),
        }
        params["blocks"].append(blk)
    return params


def prepare_params(pt):
    """One-time wrapper-side prep:
      * fold LoRA into the qkv weight:  W[:D] += B_q@A_q, W[2D:] += B_v@A_v
        (identical math to qkv(x) + B(A(x)); no alpha/r scaling in the module)
      * transpose big weights to (Cin, Cout) and cast to bf16
      * 2-D-ify vectors (LN params / biases stay f32)."""
    D = pt["norm_g"].shape[0]
    out = {
        "patch_w_t": pt["patch_w"].T.astype(jnp.bfloat16),
        "patch_b": pt["patch_b"].reshape(1, -1),
        "cls_full": (pt["cls_token"] + pt["pos_embed"][:, :1, :]).reshape(1, D),
        "pos_patch": pt["pos_embed"][:, 1:, :],
        "norm_g": pt["norm_g"].reshape(1, D),
        "norm_b": pt["norm_b"].reshape(1, D),
        "blocks": [],
    }
    for b in pt["blocks"]:
        w = b["qkv_w"]
        w = w.at[:D].add(b["lora_bq"] @ b["lora_aq"])        # q rows += B_q A_q
        w = w.at[2 * D:].add(b["lora_bv"] @ b["lora_av"])    # v rows += B_v A_v
        out["blocks"].append({
            "ln1_g": b["ln1_g"].reshape(1, D),
            "ln1_b": b["ln1_b"].reshape(1, D),
            "qkv_w_t": w.T.astype(jnp.bfloat16),             # (D, 3D)
            "qkv_b": b["qkv_b"].reshape(1, -1),
            "proj_w_t": b["proj_w"].T.astype(jnp.bfloat16),  # (D, D)
            "proj_b": b["proj_b"].reshape(1, D),
            "ln2_g": b["ln2_g"].reshape(1, D),
            "ln2_b": b["ln2_b"].reshape(1, D),
            "fc1_w_t": b["fc1_w"].T.astype(jnp.bfloat16),    # (D, Hd)
            "fc1_b": b["fc1_b"].reshape(1, -1),
            "fc2_w_t": b["fc2_w"].T.astype(jnp.bfloat16),    # (Hd, D)
            "fc2_b": b["fc2_b"].reshape(1, D),
        })
    return out


# ---------------------------------------------------------------------------
if __name__ == "__main__":
    cfg = dict(img=16, patch=4, in_chans=4, embed_dim=32, depth=2, heads=4,
               mlp_ratio=4)
    r = 4  # LoRA rank

    key = jax.random.PRNGKey(0)
    k_x, k_p = jax.random.split(key)
    x = jax.random.normal(k_x, (2, cfg["in_chans"], cfg["img"], cfg["img"]),
                          dtype=jnp.float32)  # NCHW, as the PyTorch module expects
    params = prepare_params(init_params(k_p, cfg, r))

    fwd = jax.jit(lambda xx, pp: clibd_image_encoder_forward(xx, pp, cfg))
    out = fwd(x, params)
    out = jax.block_until_ready(out)
    assert out.shape == (2, cfg["embed_dim"]), out.shape
    assert bool(jnp.all(jnp.isfinite(out)))
    print("KERNEL_OK")
</pallas_src>

<mosaic_0001>
module attributes {stable_mosaic.version = 11 : i64} {
  func.func @_patch_embed_kernel(%arg0: i32, %arg1: memref<1x16x64xbf16, #tpu.memory_space<vmem>>, %arg2: memref<64x32xbf16, #tpu.memory_space<vmem>>, %arg3: memref<1x32xf32, #tpu.memory_space<vmem>>, %arg4: memref<1x16x32xf32, #tpu.memory_space<vmem>>, %arg5: memref<1x32xf32, #tpu.memory_space<vmem>>, %arg6: memref<1x17x32xf32, #tpu.memory_space<vmem>>) attributes {dimension_semantics = [#tpu.dimension_semantics<parallel>], iteration_bounds = array<i64: 2>, scalar_prefetch = 0 : i64, scratch_operands = 0 : i64, tpu.core_type = #tpu.core_type<tc>, window_params = [{transform_indices = @transform_0, window_bounds = array<i64: 1, 16, 64>}, {pipeline_mode = #tpu.pipeline_mode<synchronous>, transform_indices = @transform_1, window_bounds = array<i64: 64, 32>}, {pipeline_mode = #tpu.pipeline_mode<synchronous>, transform_indices = @transform_2, window_bounds = array<i64: 1, 32>}, {pipeline_mode = #tpu.pipeline_mode<synchronous>, transform_indices = @transform_3, window_bounds = array<i64: 1, 16, 32>}, {pipeline_mode = #tpu.pipeline_mode<synchronous>, transform_indices = @transform_4, window_bounds = array<i64: 1, 32>}, {transform_indices = @transform_5, window_bounds = array<i64: 1, 17, 32>}]} {
    %c0 = arith.constant 0 : index
    %c0_0 = arith.constant 0 : index
    %c0_1 = arith.constant 0 : index
    %0 = vector.load %arg1[%c0, %c0_0, %c0_1] : memref<1x16x64xbf16, #tpu.memory_space<vmem>>, vector<1x16x64xbf16>
    %1 = vector.shape_cast %0 : vector<1x16x64xbf16> to vector<16x64xbf16>
    %c0_2 = arith.constant 0 : index
    %c0_3 = arith.constant 0 : index
    %2 = vector.load %arg2[%c0_2, %c0_3] : memref<64x32xbf16, #tpu.memory_space<vmem>>, vector<64x32xbf16>
    %cst = arith.constant dense<0.000000e+00> : vector<16x32xf32>
    %3 = tpu.matmul %1, %2, %cst {dimension_numbers = #tpu.dot_dimension_numbers<[1], [0], [0], [1], [0, 0, 1, 1], [], []>} : vector<16x64xbf16>, vector<64x32xbf16>, vector<16x32xf32> -> vector<16x32xf32>
    %c0_4 = arith.constant 0 : index
    %c0_5 = arith.constant 0 : index
    %4 = vector.load %arg5[%c0_4, %c0_5] : memref<1x32xf32, #tpu.memory_space<vmem>>, vector<1x32xf32>
    %c0_6 = arith.constant 0 : index
    %c0_7 = arith.constant 0 : index
    %c0_8 = arith.constant 0 : index
    %5 = vector.load %arg6[%c0_6, %c0_7, %c0_8] : memref<1x17x32xf32, #tpu.memory_space<vmem>>, vector<1x1x32xf32>
    %6 = vector.shape_cast %5 : vector<1x1x32xf32> to vector<1x32xf32>
    %7 = vector.shape_cast %4 : vector<1x32xf32> to vector<1x1x32xf32>
    tpu.vector_store %arg6[%c0_6, %c0_7, %c0_8], %7 {strides = array<i32>} : memref<1x17x32xf32, #tpu.memory_space<vmem>>, vector<1x1x32xf32>,
    %c0_9 = arith.constant 0 : index
    %c0_10 = arith.constant 0 : index
    %8 = vector.load %arg3[%c0_9, %c0_10] : memref<1x32xf32, #tpu.memory_space<vmem>>, vector<1x32xf32>
    %9 = vector.broadcast %8 : vector<1x32xf32> to vector<16x32xf32>
    %10 = arith.addf %3, %9 : vector<16x32xf32>
    %c0_11 = arith.constant 0 : index
    %c0_12 = arith.constant 0 : index
    %c0_13 = arith.constant 0 : index
    %11 = vector.load %arg4[%c0_11, %c0_12, %c0_13] : memref<1x16x32xf32, #tpu.memory_space<vmem>>, vector<1x16x32xf32>
    %12 = vector.shape_cast %11 : vector<1x16x32xf32> to vector<16x32xf32>
    %13 = arith.addf %10, %12 : vector<16x32xf32>
    %c0_14 = arith.constant 0 : index
    %c1 = arith.constant 1 : index
    %c0_15 = arith.constant 0 : index
    %14 = vector.load %arg6[%c0_14, %c1, %c0_15] : memref<1x17x32xf32, #tpu.memory_space<vmem>>, vector<1x16x32xf32>
    %15 = vector.shape_cast %14 : vector<1x16x32xf32> to vector<16x32xf32>
    %16 = vector.shape_cast %13 : vector<16x32xf32> to vector<1x16x32xf32>
    tpu.vector_store %arg6[%c0_14, %c1, %c0_15], %16 {strides = array<i32>} : memref<1x17x32xf32, #tpu.memory_space<vmem>>, vector<1x16x32xf32>,
    return
  }
  func.func @transform_0(%arg0: i32) -> (i32, i32, i32) {
    %c0_i32 = arith.constant 0 : i32
    %c0_i32_0 = arith.constant 0 : i32
    %c0_i32_1 = arith.constant 0 : i32
    return %arg0, %c0_i32, %c0_i32_0 : i32, i32, i32
  }
  func.func @transform_1(%arg0: i32) -> (i32, i32) {
    %c0_i32 = arith.constant 0 : i32
    %c0_i32_0 = arith.constant 0 : i32
    %c0_i32_1 = arith.constant 0 : i32
    return %c0_i32, %c0_i32_0 : i32, i32
  }
  func.func @transform_2(%arg0: i32) -> (i32, i32) {
    %c0_i32 = arith.constant 0 : i32
    %c0_i32_0 = arith.constant 0 : i32
    %c0_i32_1 = arith.constant 0 : i32
    return %c0_i32, %c0_i32_0 : i32, i32
  }
  func.func @transform_3(%arg0: i32) -> (i32, i32, i32) {
    %c0_i32 = arith.constant 0 : i32
    %c0_i32_0 = arith.constant 0 : i32
    %c0_i32_1 = arith.constant 0 : i32
    %c0_i32_2 = arith.constant 0 : i32
    return %c0_i32, %c0_i32_0, %c0_i32_1 : i32, i32, i32
  }
  func.func @transform_4(%arg0: i32) -> (i32, i32) {
    %c0_i32 = arith.constant 0 : i32
    %c0_i32_0 = arith.constant 0 : i32
    %c0_i32_1 = arith.constant 0 : i32
    return %c0_i32, %c0_i32_0 : i32, i32
  }
  func.func @transform_5(%arg0: i32) -> (i32, i32, i32) {
    %c0_i32 = arith.constant 0 : i32
    %c0_i32_0 = arith.constant 0 : i32
    %c0_i32_1 = arith.constant 0 : i32
    return %arg0, %c0_i32, %c0_i32_0 : i32, i32, i32
  }
}

module attributes {stable_mosaic.version = 11 : i64} {
  func.func @_encoder_block_kernel(%arg0: i32, %arg1: memref<1x17x32xf32, #tpu.memory_space<vmem>>, %arg2: memref<1x32xf32, #tpu.memory_space<vmem>>, %arg3: memref<1x32xf32, #tpu.memory_space<vmem>>, %arg4: memref<32x96xbf16, #tpu.memory_space<vmem>>, %arg5: memref<1x96xf32, #tpu.memory_space<vmem>>, %arg6: memref<32x32xbf16, #tpu.memory_space<vmem>>, %arg7: memref<1x32xf32, #tpu.memory_space<vmem>>, %arg8: memref<1x32xf32, #tpu.memory_space<vmem>>, %arg9: memref<1x32xf32, #tpu.memory_space<vmem>>, %arg10: memref<32x128xbf16, #tpu.memory_space<vmem>>, %arg11: memref<1x128xf32, #tpu.memory_space<vmem>>, %arg12: memref<128x32xbf16, #tpu.memory_space<vmem>>, %arg13: memref<1x32xf32, #tpu.memory_space<vmem>>, %arg14: memref<1x17x32xf32, #tpu.memory_space<vmem>>, %arg15: memref<17x32xbf16, #tpu.memory_space<vmem>>) attributes {dimension_semantics = [#tpu.dimension_semantics<parallel>], iteration_bounds = array<i64: 2>, scalar_prefetch = 0 : i64, scratch_operands = 1 : i64, tpu.core_type = #tpu.core_type<tc>, window_params = [{transform_indices = @transform_0, window_bounds = array<i64: 1, 17, 32>}, {pipeline_mode = #tpu.pipeline_mode<synchronous>, transform_indices = @transform_1, window_bounds = array<i64: 1, 32>}, {pipeline_mode = #tpu.pipeline_mode<synchronous>, transform_indices = @transform_2, window_bounds = array<i64: 1, 32>}, {pipeline_mode = #tpu.pipeline_mode<synchronous>, transform_indices = @transform_3, window_bounds = array<i64: 32, 96>}, {pipeline_mode = #tpu.pipeline_mode<synchronous>, transform_indices = @transform_4, window_bounds = array<i64: 1, 96>}, {pipeline_mode = #tpu.pipeline_mode<synchronous>, transform_indices = @transform_5, window_bounds = array<i64: 32, 32>}, {pipeline_mode = #tpu.pipeline_mode<synchronous>, transform_indices = @transform_6, window_bounds = array<i64: 1, 32>}, {pipeline_mode = #tpu.pipeline_mode<synchronous>, transform_indices = @transform_7, window_bounds = array<i64: 1, 32>}, {pipeline_mode = #tpu.pipeline_mode<synchronous>, transform_indices = @transform_8, window_bounds = array<i64: 1, 32>}, {pipeline_mode = #tpu.pipeline_mode<synchronous>, transform_indices = @transform_9, window_bounds = array<i64: 32, 128>}, {pipeline_mode = #tpu.pipeline_mode<synchronous>, transform_indices = @transform_10, window_bounds = array<i64: 1, 128>}, {pipeline_mode = #tpu.pipeline_mode<synchronous>, transform_indices = @transform_11, window_bounds = array<i64: 128, 32>}, {pipeline_mode = #tpu.pipeline_mode<synchronous>, transform_indices = @transform_12, window_bounds = array<i64: 1, 32>}, {transform_indices = @transform_13, window_bounds = array<i64: 1, 17, 32>}]} {
    %c0 = arith.constant 0 : index
    %c0_0 = arith.constant 0 : index
    %c0_1 = arith.constant 0 : index
    %0 = vector.load %arg1[%c0, %c0_0, %c0_1] : memref<1x17x32xf32, #tpu.memory_space<vmem>>, vector<1x17x32xf32>
    %1 = vector.shape_cast %0 : vector<1x17x32xf32> to vector<17x32xf32>
    %cst = arith.constant dense<0.000000e+00> : vector<17xf32>
    %2 = vector.multi_reduction <add>, %1, %cst [1] : vector<17x32xf32> to vector<17xf32>
    %3 = vector.shape_cast %2 : vector<17xf32> to vector<17x1xf32>
    %cst_2 = arith.constant 3.200000e+01 : f32
    %4 = vector.broadcast %cst_2 : f32 to vector<17x1xf32>
    %5 = arith.divf %3, %4 : vector<17x1xf32>
    %6 = vector.broadcast %5 : vector<17x1xf32> to vector<17x32xf32>
    %7 = arith.subf %1, %6 : vector<17x32xf32>
    %8 = arith.mulf %7, %7 : vector<17x32xf32>
    %cst_3 = arith.constant dense<0.000000e+00> : vector<17xf32>
    %9 = vector.multi_reduction <add>, %8, %cst_3 [1] : vector<17x32xf32> to vector<17xf32>
    %10 = vector.shape_cast %9 : vector<17xf32> to vector<17x1xf32>
    %cst_4 = arith.constant 3.200000e+01 : f32
    %11 = vector.broadcast %cst_4 : f32 to vector<17x1xf32>
    %12 = arith.divf %10, %11 : vector<17x1xf32>
    %13 = vector.broadcast %5 : vector<17x1xf32> to vector<17x32xf32>
    %14 = arith.subf %1, %13 : vector<17x32xf32>
    %cst_5 = arith.constant 9.99999997E-7 : f32
    %15 = vector.broadcast %cst_5 : f32 to vector<17x1xf32>
    %16 = arith.addf %12, %15 : vector<17x1xf32>
    %17 = math.rsqrt %16 : vector<17x1xf32>
    %18 = vector.broadcast %17 : vector<17x1xf32> to vector<17x32xf32>
    %19 = arith.mulf %14, %18 : vector<17x32xf32>
    %c0_6 = arith.constant 0 : index
    %c0_7 = arith.constant 0 : index
    %20 = vector.load %arg2[%c0_6, %c0_7] : memref<1x32xf32, #tpu.memory_space<vmem>>, vector<1x32xf32>
    %21 = vector.broadcast %20 : vector<1x32xf32> to vector<17x32xf32>
    %22 = arith.mulf %19, %21 : vector<17x32xf32>
    %c0_8 = arith.constant 0 : index
    %c0_9 = arith.constant 0 : index
    %23 = vector.load %arg3[%c0_8, %c0_9] : memref<1x32xf32, #tpu.memory_space<vmem>>, vector<1x32xf32>
    %24 = vector.broadcast %23 : vector<1x32xf32> to vector<17x32xf32>
    %25 = arith.addf %22, %24 : vector<17x32xf32>
    %26 = arith.truncf %25 : vector<17x32xf32> to vector<17x32xbf16>
    %c0_10 = arith.constant 0 : index
    %c0_11 = arith.constant 0 : index
    %27 = vector.load %arg4[%c0_10, %c0_11] : memref<32x96xbf16, #tpu.memory_space<vmem>>, vector<32x96xbf16>
    %cst_12 = arith.constant dense<0.000000e+00> : vector<17x96xf32>
    %28 = tpu.matmul %26, %27, %cst_12 {dimension_numbers = #tpu.dot_dimension_numbers<[1], [0], [0], [1], [0, 0, 1, 1], [], []>} : vector<17x32xbf16>, vector<32x96xbf16>, vector<17x96xf32> -> vector<17x96xf32>
    %c0_13 = arith.constant 0 : index
    %c0_14 = arith.constant 0 : index
    %29 = vector.load %arg5[%c0_13, %c0_14] : memref<1x96xf32, #tpu.memory_space<vmem>>, vector<1x96xf32>
    %30 = vector.broadcast %29 : vector<1x96xf32> to vector<17x96xf32>
    %31 = arith.addf %28, %30 : vector<17x96xf32>
    %32 = vector.extract_strided_slice %31 {offsets = [0, 0], sizes = [17, 32], strides = [1, 1]} : vector<17x96xf32> to vector<17x32xf32>
    %cst_15 = arith.constant 0.353553385 : f32
    %33 = vector.broadcast %cst_15 : f32 to vector<17x32xf32>
    %34 = arith.mulf %32, %33 : vector<17x32xf32>
    %35 = arith.truncf %34 : vector<17x32xf32> to vector<17x32xbf16>
    %36 = vector.extract_strided_slice %31 {offsets = [0, 32], sizes = [17, 32], strides = [1, 1]} : vector<17x96xf32> to vector<17x32xf32>
    %37 = arith.truncf %36 : vector<17x32xf32> to vector<17x32xbf16>
    %38 = vector.extract_strided_slice %31 {offsets = [0, 64], sizes = [17, 32], strides = [1, 1]} : vector<17x96xf32> to vector<17x32xf32>
    %39 = arith.truncf %38 : vector<17x32xf32> to vector<17x32xbf16>
    %40 = vector.extract_strided_slice %35 {offsets = [0, 0], sizes = [17, 8], strides = [1, 1]} : vector<17x32xbf16> to vector<17x8xbf16>
    %41 = vector.extract_strided_slice %37 {offsets = [0, 0], sizes = [17, 8], strides = [1, 1]} : vector<17x32xbf16> to vector<17x8xbf16>
    %cst_16 = arith.constant dense<0.000000e+00> : vector<17x17xf32>
    %42 = tpu.matmul %40, %41, %cst_16 {dimension_numbers = #tpu.dot_dimension_numbers<[1], [1], [0], [0], [0, 0, 1, 0], [], []>} : vector<17x8xbf16>, vector<17x8xbf16>, vector<17x17xf32> -> vector<17x17xf32>
    %cst_17 = arith.constant dense<0xFF800000> : vector<17xf32>
    %43 = vector.multi_reduction <maximumf>, %42, %cst_17 [1] : vector<17x17xf32> to vector<17xf32>
    %44 = vector.shape_cast %43 : vector<17xf32> to vector<17x1xf32>
    %45 = vector.broadcast %44 : vector<17x1xf32> to vector<17x17xf32>
    %46 = arith.subf %42, %45 : vector<17x17xf32>
    %47 = math.exp %46 : vector<17x17xf32>
    %cst_18 = arith.constant dense<0.000000e+00> : vector<17xf32>
    %48 = vector.multi_reduction <add>, %47, %cst_18 [1] : vector<17x17xf32> to vector<17xf32>
    %49 = vector.shape_cast %48 : vector<17xf32> to vector<17x1xf32>
    %50 = arith.truncf %47 : vector<17x17xf32> to vector<17x17xbf16>
    %51 = vector.extract_strided_slice %39 {offsets = [0, 0], sizes = [17, 8], strides = [1, 1]} : vector<17x32xbf16> to vector<17x8xbf16>
    %cst_19 = arith.constant dense<0.000000e+00> : vector<17x8xf32>
    %52 = tpu.matmul %50, %51, %cst_19 {dimension_numbers = #tpu.dot_dimension_numbers<[1], [0], [0], [1], [0, 0, 1, 1], [], []>} : vector<17x17xbf16>, vector<17x8xbf16>, vector<17x8xf32> -> vector<17x8xf32>
    %53 = tpu.reciprocal %49 {approx = true} : vector<17x1xf32> -> vector<17x1xf32>
    %54 = vector.broadcast %53 : vector<17x1xf32> to vector<17x8xf32>
    %55 = arith.mulf %52, %54 : vector<17x8xf32>
    %56 = arith.truncf %55 : vector<17x8xf32> to vector<17x8xbf16>
    %c0_20 = arith.constant 0 : index
    %c0_21 = arith.constant 0 : index
    %57 = vector.load %arg15[%c0_20, %c0_21] : memref<17x32xbf16, #tpu.memory_space<vmem>>, vector<17x8xbf16>
    tpu.vector_store %arg15[%c0_20, %c0_21], %56 {strides = array<i32>} : memref<17x32xbf16, #tpu.memory_space<vmem>>, vector<17x8xbf16>,
    %58 = vector.extract_strided_slice %35 {offsets = [0, 8], sizes = [17, 8], strides = [1, 1]} : vector<17x32xbf16> to vector<17x8xbf16>
    %59 = vector.extract_strided_slice %37 {offsets = [0, 8], sizes = [17, 8], strides = [1, 1]} : vector<17x32xbf16> to vector<17x8xbf16>
    %cst_22 = arith.constant dense<0.000000e+00> : vector<17x17xf32>
    %60 = tpu.matmul %58, %59, %cst_22 {dimension_numbers = #tpu.dot_dimension_numbers<[1], [1], [0], [0], [0, 0, 1, 0], [], []>} : vector<17x8xbf16>, vector<17x8xbf16>, vector<17x17xf32> -> vector<17x17xf32>
    %cst_23 = arith.constant dense<0xFF800000> : vector<17xf32>
    %61 = vector.multi_reduction <maximumf>, %60, %cst_23 [1] : vector<17x17xf32> to vector<17xf32>
    %62 = vector.shape_cast %61 : vector<17xf32> to vector<17x1xf32>
    %63 = vector.broadcast %62 : vector<17x1xf32> to vector<17x17xf32>
    %64 = arith.subf %60, %63 : vector<17x17xf32>
    %65 = math.exp %64 : vector<17x17xf32>
    %cst_24 = arith.constant dense<0.000000e+00> : vector<17xf32>
    %66 = vector.multi_reduction <add>, %65, %cst_24 [1] : vector<17x17xf32> to vector<17xf32>
    %67 = vector.shape_cast %66 : vector<17xf32> to vector<17x1xf32>
    %68 = arith.truncf %65 : vector<17x17xf32> to vector<17x17xbf16>
    %69 = vector.extract_strided_slice %39 {offsets = [0, 8], sizes = [17, 8], strides = [1, 1]} : vector<17x32xbf16> to vector<17x8xbf16>
    %cst_25 = arith.constant dense<0.000000e+00> : vector<17x8xf32>
    %70 = tpu.matmul %68, %69, %cst_25 {dimension_numbers = #tpu.dot_dimension_numbers<[1], [0], [0], [1], [0, 0, 1, 1], [], []>} : vector<17x17xbf16>, vector<17x8xbf16>, vector<17x8xf32> -> vector<17x8xf32>
    %71 = tpu.reciprocal %67 {approx = true} : vector<17x1xf32> -> vector<17x1xf32>
    %72 = vector.broadcast %71 : vector<17x1xf32> to vector<17x8xf32>
    %73 = arith.mulf %70, %72 : vector<17x8xf32>
    %74 = arith.truncf %73 : vector<17x8xf32> to vector<17x8xbf16>
    %c0_26 = arith.constant 0 : index
    %c8 = arith.constant 8 : index
    %75 = vector.load %arg15[%c0_26, %c8] : memref<17x32xbf16, #tpu.memory_space<vmem>>, vector<17x8xbf16>
    tpu.vector_store %arg15[%c0_26, %c8], %74 {strides = array<i32>} : memref<17x32xbf16, #tpu.memory_space<vmem>>, vector<17x8xbf16>,
    %76 = vector.extract_strided_slice %35 {offsets = [0, 16], sizes = [17, 8], strides = [1, 1]} : vector<17x32xbf16> to vector<17x8xbf16>
    %77 = vector.extract_strided_slice %37 {offsets = [0, 16], sizes = [17, 8], strides = [1, 1]} : vector<17x32xbf16> to vector<17x8xbf16>
    %cst_27 = arith.constant dense<0.000000e+00> : vector<17x17xf32>
    %78 = tpu.matmul %76, %77, %cst_27 {dimension_numbers = #tpu.dot_dimension_numbers<[1], [1], [0], [0], [0, 0, 1, 0], [], []>} : vector<17x8xbf16>, vector<17x8xbf16>, vector<17x17xf32> -> vector<17x17xf32>
    %cst_28 = arith.constant dense<0xFF800000> : vector<17xf32>
    %79 = vector.multi_reduction <maximumf>, %78, %cst_28 [1] : vector<17x17xf32> to vector<17xf32>
    %80 = vector.shape_cast %79 : vector<17xf32> to vector<17x1xf32>
    %81 = vector.broadcast %80 : vector<17x1xf32> to vector<17x17xf32>
    %82 = arith.subf %78, %81 : vector<17x17xf32>
    %83 = math.exp %82 : vector<17x17xf32>
    %cst_29 = arith.constant dense<0.000000e+00> : vector<17xf32>
    %84 = vector.multi_reduction <add>, %83, %cst_29 [1] : vector<17x17xf32> to vector<17xf32>
    %85 = vector.shape_cast %84 : vector<17xf32> to vector<17x1xf32>
    %86 = arith.truncf %83 : vector<17x17xf32> to vector<17x17xbf16>
    %87 = vector.extract_strided_slice %39 {offsets = [0, 16], sizes = [17, 8], strides = [1, 1]} : vector<17x32xbf16> to vector<17x8xbf16>
    %cst_30 = arith.constant dense<0.000000e+00> : vector<17x8xf32>
    %88 = tpu.matmul %86, %87, %cst_30 {dimension_numbers = #tpu.dot_dimension_numbers<[1], [0], [0], [1], [0, 0, 1, 1], [], []>} : vector<17x17xbf16>, vector<17x8xbf16>, vector<17x8xf32> -> vector<17x8xf32>
    %89 = tpu.reciprocal %85 {approx = true} : vector<17x1xf32> -> vector<17x1xf32>
    %90 = vector.broadcast %89 : vector<17x1xf32> to vector<17x8xf32>
    %91 = arith.mulf %88, %90 : vector<17x8xf32>
    %92 = arith.truncf %91 : vector<17x8xf32> to vector<17x8xbf16>
    %c0_31 = arith.constant 0 : index
    %c16 = arith.constant 16 : index
    %93 = vector.load %arg15[%c0_31, %c16] : memref<17x32xbf16, #tpu.memory_space<vmem>>, vector<17x8xbf16>
    tpu.vector_store %arg15[%c0_31, %c16], %92 {strides = array<i32>} : memref<17x32xbf16, #tpu.memory_space<vmem>>, vector<17x8xbf16>,
    %94 = vector.extract_strided_slice %35 {offsets = [0, 24], sizes = [17, 8], strides = [1, 1]} : vector<17x32xbf16> to vector<17x8xbf16>
    %95 = vector.extract_strided_slice %37 {offsets = [0, 24], sizes = [17, 8], strides = [1, 1]} : vector<17x32xbf16> to vector<17x8xbf16>
    %cst_32 = arith.constant dense<0.000000e+00> : vector<17x17xf32>
    %96 = tpu.matmul %94, %95, %cst_32 {dimension_numbers = #tpu.dot_dimension_numbers<[1], [1], [0], [0], [0, 0, 1, 0], [], []>} : vector<17x8xbf16>, vector<17x8xbf16>, vector<17x17xf32> -> vector<17x17xf32>
    %cst_33 = arith.constant dense<0xFF800000> : vector<17xf32>
    %97 = vector.multi_reduction <maximumf>, %96, %cst_33 [1] : vector<17x17xf32> to vector<17xf32>
    %98 = vector.shape_cast %97 : vector<17xf32> to vector<17x1xf32>
    %99 = vector.broadcast %98 : vector<17x1xf32> to vector<17x17xf32>
    %100 = arith.subf %96, %99 : vector<17x17xf32>
    %101 = math.exp %100 : vector<17x17xf32>
    %cst_34 = arith.constant dense<0.000000e+00> : vector<17xf32>
    %102 = vector.multi_reduction <add>, %101, %cst_34 [1] : vector<17x17xf32> to vector<17xf32>
    %103 = vector.shape_cast %102 : vector<17xf32> to vector<17x1xf32>
    %104 = arith.truncf %101 : vector<17x17xf32> to vector<17x17xbf16>
    %105 = vector.extract_strided_slice %39 {offsets = [0, 24], sizes = [17, 8], strides = [1, 1]} : vector<17x32xbf16> to vector<17x8xbf16>
    %cst_35 = arith.constant dense<0.000000e+00> : vector<17x8xf32>
    %106 = tpu.matmul %104, %105, %cst_35 {dimension_numbers = #tpu.dot_dimension_numbers<[1], [0], [0], [1], [0, 0, 1, 1], [], []>} : vector<17x17xbf16>, vector<17x8xbf16>, vector<17x8xf32> -> vector<17x8xf32>
    %107 = tpu.reciprocal %103 {approx = true} : vector<17x1xf32> -> vector<17x1xf32>
    %108 = vector.broadcast %107 : vector<17x1xf32> to vector<17x8xf32>
    %109 = arith.mulf %106, %108 : vector<17x8xf32>
    %110 = arith.truncf %109 : vector<17x8xf32> to vector<17x8xbf16>
    %c0_36 = arith.constant 0 : index
    %c24 = arith.constant 24 : index
    %111 = vector.load %arg15[%c0_36, %c24] : memref<17x32xbf16, #tpu.memory_space<vmem>>, vector<17x8xbf16>
    tpu.vector_store %arg15[%c0_36, %c24], %110 {strides = array<i32>} : memref<17x32xbf16, #tpu.memory_space<vmem>>, vector<17x8xbf16>,
    %c0_37 = arith.constant 0 : index
    %c0_38 = arith.constant 0 : index
    %112 = vector.load %arg15[%c0_37, %c0_38] : memref<17x32xbf16, #tpu.memory_space<vmem>>, vector<17x32xbf16>
    %c0_39 = arith.constant 0 : index
    %c0_40 = arith.constant 0 : index
    %113 = vector.load %arg6[%c0_39, %c0_40] : memref<32x32xbf16, #tpu.memory_space<vmem>>, vector<32x32xbf16>
    %cst_41 = arith.constant dense<0.000000e+00> : vector<17x32xf32>
    %114 = tpu.matmul %112, %113, %cst_41 {dimension_numbers = #tpu.dot_dimension_numbers<[1], [0], [0], [1], [0, 0, 1, 1], [], []>} : vector<17x32xbf16>, vector<32x32xbf16>, vector<17x32xf32> -> vector<17x32xf32>
    %115 = arith.addf %1, %114 : vector<17x32xf32>
    %c0_42 = arith.constant 0 : index
    %c0_43 = arith.constant 0 : index
    %116 = vector.load %arg7[%c0_42, %c0_43] : memref<1x32xf32, #tpu.memory_space<vmem>>, vector<1x32xf32>
    %117 = vector.broadcast %116 : vector<1x32xf32> to vector<17x32xf32>
    %118 = arith.addf %115, %117 : vector<17x32xf32>
    %cst_44 = arith.constant dense<0.000000e+00> : vector<17xf32>
    %119 = vector.multi_reduction <add>, %118, %cst_44 [1] : vector<17x32xf32> to vector<17xf32>
    %120 = vector.shape_cast %119 : vector<17xf32> to vector<17x1xf32>
    %cst_45 = arith.constant 3.200000e+01 : f32
    %121 = vector.broadcast %cst_45 : f32 to vector<17x1xf32>
    %122 = arith.divf %120, %121 : vector<17x1xf32>
    %123 = vector.broadcast %122 : vector<17x1xf32> to vector<17x32xf32>
    %124 = arith.subf %118, %123 : vector<17x32xf32>
    %125 = arith.mulf %124, %124 : vector<17x32xf32>
    %cst_46 = arith.constant dense<0.000000e+00> : vector<17xf32>
    %126 = vector.multi_reduction <add>, %125, %cst_46 [1] : vector<17x32xf32> to vector<17xf32>
    %127 = vector.shape_cast %126 : vector<17xf32> to vector<17x1xf32>
    %cst_47 = arith.constant 3.200000e+01 : f32
    %128 = vector.broadcast %cst_47 : f32 to vector<17x1xf32>
    %129 = arith.divf %127, %128 : vector<17x1xf32>
    %130 = vector.broadcast %122 : vector<17x1xf32> to vector<17x32xf32>
    %131 = arith.subf %118, %130 : vector<17x32xf32>
    %cst_48 = arith.constant 9.99999997E-7 : f32
    %132 = vector.broadcast %cst_48 : f32 to vector<17x1xf32>
    %133 = arith.addf %129, %132 : vector<17x1xf32>
    %134 = math.rsqrt %133 : vector<17x1xf32>
    %135 = vector.broadcast %134 : vector<17x1xf32> to vector<17x32xf32>
    %136 = arith.mulf %131, %135 : vector<17x32xf32>
    %c0_49 = arith.constant 0 : index
    %c0_50 = arith.constant 0 : index
    %137 = vector.load %arg8[%c0_49, %c0_50] : memref<1x32xf32, #tpu.memory_space<vmem>>, vector<1x32xf32>
    %138 = vector.broadcast %137 : vector<1x32xf32> to vector<17x32xf32>
    %139 = arith.mulf %136, %138 : vector<17x32xf32>
    %c0_51 = arith.constant 0 : index
    %c0_52 = arith.constant 0 : index
    %140 = vector.load %arg9[%c0_51, %c0_52] : memref<1x32xf32, #tpu.memory_space<vmem>>, vector<1x32xf32>
    %141 = vector.broadcast %140 : vector<1x32xf32> to vector<17x32xf32>
    %142 = arith.addf %139, %141 : vector<17x32xf32>
    %143 = arith.truncf %142 : vector<17x32xf32> to vector<17x32xbf16>
    %c0_53 = arith.constant 0 : index
    %c0_54 = arith.constant 0 : index
    %144 = vector.load %arg10[%c0_53, %c0_54] : memref<32x128xbf16, #tpu.memory_space<vmem>>, vector<32x128xbf16>
    %cst_55 = arith.constant dense<0.000000e+00> : vector<17x128xf32>
    %145 = tpu.matmul %143, %144, %cst_55 {dimension_numbers = #tpu.dot_dimension_numbers<[1], [0], [0], [1], [0, 0, 1, 1], [], []>} : vector<17x32xbf16>, vector<32x128xbf16>, vector<17x128xf32> -> vector<17x128xf32>
    %c0_56 = arith.constant 0 : index
    %c0_57 = arith.constant 0 : index
    %146 = vector.load %arg11[%c0_56, %c0_57] : memref<1x128xf32, #tpu.memory_space<vmem>>, vector<1x128xf32>
    %147 = vector.broadcast %146 : vector<1x128xf32> to vector<17x128xf32>
    %148 = arith.addf %145, %147 : vector<17x128xf32>
    %cst_58 = arith.constant 5.000000e-01 : f32
    %149 = vector.broadcast %cst_58 : f32 to vector<17x128xf32>
    %150 = arith.mulf %149, %148 : vector<17x128xf32>
    %cst_59 = arith.constant 0.707106769 : f32
    %151 = vector.broadcast %cst_59 : f32 to vector<17x128xf32>
    %152 = arith.mulf %148, %151 : vector<17x128xf32>
    %153 = math.erf %152 : vector<17x128xf32>
    %cst_60 = arith.constant 1.000000e+00 : f32
    %154 = vector.broadcast %cst_60 : f32 to vector<17x128xf32>
    %155 = arith.addf %154, %153 : vector<17x128xf32>
    %156 = arith.mulf %150, %155 : vector<17x128xf32>
    %157 = arith.truncf %156 : vector<17x128xf32> to vector<17x128xbf16>
    %c0_61 = arith.constant 0 : index
    %c0_62 = arith.constant 0 : index
    %158 = vector.load %arg12[%c0_61, %c0_62] : memref<128x32xbf16, #tpu.memory_space<vmem>>, vector<128x32xbf16>
    %cst_63 = arith.constant dense<0.000000e+00> : vector<17x32xf32>
    %159 = tpu.matmul %157, %158, %cst_63 {dimension_numbers = #tpu.dot_dimension_numbers<[1], [0], [0], [1], [0, 0, 1, 1], [], []>} : vector<17x128xbf16>, vector<128x32xbf16>, vector<17x32xf32> -> vector<17x32xf32>
    %160 = arith.addf %118, %159 : vector<17x32xf32>
    %c0_64 = arith.constant 0 : index
    %c0_65 = arith.constant 0 : index
    %161 = vector.load %arg13[%c0_64, %c0_65] : memref<1x32xf32, #tpu.memory_space<vmem>>, vector<1x32xf32>
    %162 = vector.broadcast %161 : vector<1x32xf32> to vector<17x32xf32>
    %163 = arith.addf %160, %162 : vector<17x32xf32>
    %c0_66 = arith.constant 0 : index
    %c0_67 = arith.constant 0 : index
    %c0_68 = arith.constant 0 : index
    %164 = vector.load %arg14[%c0_66, %c0_67, %c0_68] : memref<1x17x32xf32, #tpu.memory_space<vmem>>, vector<1x17x32xf32>
    %165 = vector.shape_cast %164 : vector<1x17x32xf32> to vector<17x32xf32>
    %166 = vector.shape_cast %163 : vector<17x32xf32> to vector<1x17x32xf32>
    tpu.vector_store %arg14[%c0_66, %c0_67, %c0_68], %166 {strides = array<i32>} : memref<1x17x32xf32, #tpu.memory_space<vmem>>, vector<1x17x32xf32>,
    return
  }
  func.func @transform_0(%arg0: i32) -> (i32, i32, i32) {
    %c0_i32 = arith.constant 0 : i32
    %c0_i32_0 = arith.constant 0 : i32
    %c0_i32_1 = arith.constant 0 : i32
    return %arg0, %c0_i32, %c0_i32_0 : i32, i32, i32
  }
  func.func @transform_1(%arg0: i32) -> (i32, i32) {
    %c0_i32 = arith.constant 0 : i32
    %c0_i32_0 = arith.constant 0 : i32
    %c0_i32_1 = arith.constant 0 : i32
    return %c0_i32, %c0_i32_0 : i32, i32
  }
  func.func @transform_2(%arg0: i32) -> (i32, i32) {
    %c0_i32 = arith.constant 0 : i32
    %c0_i32_0 = arith.constant 0 : i32
    %c0_i32_1 = arith.constant 0 : i32
    return %c0_i32, %c0_i32_0 : i32, i32
  }
  func.func @transform_3(%arg0: i32) -> (i32, i32) {
    %c0_i32 = arith.constant 0 : i32
    %c0_i32_0 = arith.constant 0 : i32
    %c0_i32_1 = arith.constant 0 : i32
    return %c0_i32, %c0_i32_0 : i32, i32
  }
  func.func @transform_4(%arg0: i32) -> (i32, i32) {
    %c0_i32 = arith.constant 0 : i32
    %c0_i32_0 = arith.constant 0 : i32
    %c0_i32_1 = arith.constant 0 : i32
    return %c0_i32, %c0_i32_0 : i32, i32
  }
  func.func @transform_5(%arg0: i32) -> (i32, i32) {
    %c0_i32 = arith.constant 0 : i32
    %c0_i32_0 = arith.constant 0 : i32
    %c0_i32_1 = arith.constant 0 : i32
    return %c0_i32, %c0_i32_0 : i32, i32
  }
  func.func @transform_6(%arg0: i32) -> (i32, i32) {
    %c0_i32 = arith.constant 0 : i32
    %c0_i32_0 = arith.constant 0 : i32
    %c0_i32_1 = arith.constant 0 : i32
    return %c0_i32, %c0_i32_0 : i32, i32
  }
  func.func @transform_7(%arg0: i32) -> (i32, i32) {
    %c0_i32 = arith.constant 0 : i32
    %c0_i32_0 = arith.constant 0 : i32
    %c0_i32_1 = arith.constant 0 : i32
    return %c0_i32, %c0_i32_0 : i32, i32
  }
  func.func @transform_8(%arg0: i32) -> (i32, i32) {
    %c0_i32 = arith.constant 0 : i32
    %c0_i32_0 = arith.constant 0 : i32
    %c0_i32_1 = arith.constant 0 : i32
    return %c0_i32, %c0_i32_0 : i32, i32
  }
  func.func @transform_9(%arg0: i32) -> (i32, i32) {
    %c0_i32 = arith.constant 0 : i32
    %c0_i32_0 = arith.constant 0 : i32
    %c0_i32_1 = arith.constant 0 : i32
    return %c0_i32, %c0_i32_0 : i32, i32
  }
  func.func @transform_10(%arg0: i32) -> (i32, i32) {
    %c0_i32 = arith.constant 0 : i32
    %c0_i32_0 = arith.constant 0 : i32
    %c0_i32_1 = arith.constant 0 : i32
    return %c0_i32, %c0_i32_0 : i32, i32
  }
  func.func @transform_11(%arg0: i32) -> (i32, i32) {
    %c0_i32 = arith.constant 0 : i32
    %c0_i32_0 = arith.constant 0 : i32
    %c0_i32_1 = arith.constant 0 : i32
    return %c0_i32, %c0_i32_0 : i32, i32
  }
  func.func @transform_12(%arg0: i32) -> (i32, i32) {
    %c0_i32 = arith.constant 0 : i32
    %c0_i32_0 = arith.constant 0 : i32
    %c0_i32_1 = arith.constant 0 : i32
    return %c0_i32, %c0_i32_0 : i32, i32
  }
  func.func @transform_13(%arg0: i32) -> (i32, i32, i32) {
    %c0_i32 = arith.constant 0 : i32
    %c0_i32_0 = arith.constant 0 : i32
    %c0_i32_1 = arith.constant 0 : i32
    return %arg0, %c0_i32, %c0_i32_0 : i32, i32, i32
  }
}

module attributes {stable_mosaic.version = 11 : i64} {
  func.func @_final_ln_kernel(%arg0: memref<2x1x32xf32, #tpu.memory_space<vmem>>, %arg1: memref<1x32xf32, #tpu.memory_space<vmem>>, %arg2: memref<1x32xf32, #tpu.memory_space<vmem>>, %arg3: memref<2x1x32xf32, #tpu.memory_space<vmem>>) attributes {dimension_semantics = [], scalar_prefetch = 0 : i64, scratch_operands = 0 : i64, tpu.core_type = #tpu.core_type<tc>} {
    %c0 = arith.constant 0 : index
    %c0_0 = arith.constant 0 : index
    %c0_1 = arith.constant 0 : index
    %0 = vector.load %arg0[%c0, %c0_0, %c0_1] : memref<2x1x32xf32, #tpu.memory_space<vmem>>, vector<2x1x32xf32>
    %cst = arith.constant dense<0.000000e+00> : vector<2x1xf32>
    %1 = vector.multi_reduction <add>, %0, %cst [2] : vector<2x1x32xf32> to vector<2x1xf32>
    %2 = vector.shape_cast %1 : vector<2x1xf32> to vector<2x1x1xf32>
    %cst_2 = arith.constant 3.200000e+01 : f32
    %3 = vector.broadcast %cst_2 : f32 to vector<2x1x1xf32>
    %4 = arith.divf %2, %3 : vector<2x1x1xf32>
    %5 = vector.broadcast %4 : vector<2x1x1xf32> to vector<2x1x32xf32>
    %6 = arith.subf %0, %5 : vector<2x1x32xf32>
    %7 = arith.mulf %6, %6 : vector<2x1x32xf32>
    %cst_3 = arith.constant dense<0.000000e+00> : vector<2x1xf32>
    %8 = vector.multi_reduction <add>, %7, %cst_3 [2] : vector<2x1x32xf32> to vector<2x1xf32>
    %9 = vector.shape_cast %8 : vector<2x1xf32> to vector<2x1x1xf32>
    %cst_4 = arith.constant 3.200000e+01 : f32
    %10 = vector.broadcast %cst_4 : f32 to vector<2x1x1xf32>
    %11 = arith.divf %9, %10 : vector<2x1x1xf32>
    %12 = vector.broadcast %4 : vector<2x1x1xf32> to vector<2x1x32xf32>
    %13 = arith.subf %0, %12 : vector<2x1x32xf32>
    %cst_5 = arith.constant 9.99999997E-7 : f32
    %14 = vector.broadcast %cst_5 : f32 to vector<2x1x1xf32>
    %15 = arith.addf %11, %14 : vector<2x1x1xf32>
    %16 = math.rsqrt %15 : vector<2x1x1xf32>
    %17 = vector.broadcast %16 : vector<2x1x1xf32> to vector<2x1x32xf32>
    %18 = arith.mulf %13, %17 : vector<2x1x32xf32>
    %c0_6 = arith.constant 0 : index
    %c0_7 = arith.constant 0 : index
    %19 = vector.load %arg1[%c0_6, %c0_7] : memref<1x32xf32, #tpu.memory_space<vmem>>, vector<1x32xf32>
    %20 = vector.shape_cast %19 : vector<1x32xf32> to vector<1x1x32xf32>
    %21 = vector.broadcast %20 : vector<1x1x32xf32> to vector<2x1x32xf32>
    %22 = arith.mulf %18, %21 : vector<2x1x32xf32>
    %c0_8 = arith.constant 0 : index
    %c0_9 = arith.constant 0 : index
    %23 = vector.load %arg2[%c0_8, %c0_9] : memref<1x32xf32, #tpu.memory_space<vmem>>, vector<1x32xf32>
    %24 = vector.shape_cast %23 : vector<1x32xf32> to vector<1x1x32xf32>
    %25 = vector.broadcast %24 : vector<1x1x32xf32> to vector<2x1x32xf32>
    %26 = arith.addf %22, %25 : vector<2x1x32xf32>
    %c0_10 = arith.constant 0 : index
    %c0_11 = arith.constant 0 : index
    %c0_12 = arith.constant 0 : index
    %27 = vector.load %arg3[%c0_10, %c0_11, %c0_12] : memref<2x1x32xf32, #tpu.memory_space<vmem>>, vector<2x1x32xf32>
    tpu.vector_store %arg3[%c0_10, %c0_11, %c0_12], %26 {strides = array<i32>} : memref<2x1x32xf32, #tpu.memory_space<vmem>>, vector<2x1x32xf32>,
    return
  }
}

</mosaic_0001>

<llo_original>
// kernel: _lambda_.7
$region0: #{_lambda_.7}
  #allocation0 [shape = 'u32[]', space=smem, size = 0x4, offset = 0x4, fixed_abs, tag = 'smem constant byte address 0x4 - core index']
  #allocation1 [shape = 'u32[144,128]{1,0:T(1,128)}', space=vmem, size = 0x12000, scoped, tag = 'internal scratch']
  %s0 = inlined_call_operand.vmem [shape: f32[2,1,32], index: 0, kind: input, shape index: {}]
  %s1 = inlined_call_operand.vmem [shape: f32[1,32], index: 1, kind: input, shape index: {}]
  %s2 = inlined_call_operand.vmem [shape: f32[1,32], index: 2, kind: input, shape index: {}]
  %s3 = inlined_call_operand.hbm [shape: f32[2,1,32], index: 3, kind: output, shape index: {}]
  %s4 = sld [smem:[#allocation0]]
  $region22: #{_lambda_.7} parent=0
    _
  %s6 = ssub.s32 1, %s4
  %s7 = scalar_select 0, %s6, %s4
  $region1: #{_lambda_.7} parent=0
    #allocation2 [shape = 'u8[1024]{0}', space=vmem, size = 0x400, scoped, tag = 'output window, operand 0, single buffered']
    #allocation3 [shape = 's32[1]{0}', space=sflag, size = 0x4, scoped, tag = 'scoped memory for _lambda_.7']
    %8 = vsyncpa [#allocation3], 0
    // Predicated region
    $region2: #{_lambda_.7} parent=1 // pred_check
      _
    $region3: #{_lambda_.7} parent=1 // pred_check_branch
      %10 = sbr.rel (0) target = $region5
    $region4: #{_lambda_.7} parent=1 // pred_region
      _
    $region5: #{_lambda_.7} parent=1 // pred_fallthru
      _
    // Predicated region
    $region6: #{_lambda_.7} parent=1 // pred_check
      _
    $region7: #{_lambda_.7} parent=1 // pred_check_branch
      %12 = sbr.rel (0) target = $region9
    $region8: #{_lambda_.7} parent=1 // pred_region
      _
    $region9: #{_lambda_.7} parent=1 // pred_fallthru
      _
    // Predicated region
    $region10: #{_lambda_.7} parent=1 // pred_check
      _
    $region11: #{_lambda_.7} parent=1 // pred_check_branch
      %14 = sbr.rel (0) target = $region13
    $region12: #{_lambda_.7} parent=1 // pred_region
      _
    $region13: #{_lambda_.7} parent=1 // pred_fallthru
      _
    %v15 = vld [vmem:[%s0] sm:$0x1]
    %v16 = vld [vmem:[%s0 + $0x1] sm:$0x1]
    %vm17 = vcmask 253952
    %v18 = vsel %vm17, %v15, 0.0
    %19 = vadd.xlane.f32.xlu0 %v18
    %v20 = vpop.xlane.xlu0 %19
    %v21 = vsel %vm17, %v16, 0.0
    %22 = vadd.xlane.f32.xlu0 %v21
    %v23 = vpop.xlane.xlu0 %22
    %v24 = vrcp.pop 32.0
    %v25 = vmul.f32 %v20, %v24
    %v26 = vmul.f32 %v23, %v24
    %v27 = vsub.f32 %v15, %v25
    %v28 = vsub.f32 %v16, %v26
    %v29 = vmul.f32 %v27, %v27
    %v30 = vmul.f32 %v28, %v28
    %v31 = vsel %vm17, %v29, 0.0
    %32 = vadd.xlane.f32.xlu0 %v31
    %v33 = vpop.xlane.xlu0 %32
    %v34 = vsel %vm17, %v30, 0.0
    %35 = vadd.xlane.f32.xlu0 %v34
    %v36 = vpop.xlane.xlu0 %35
    %v37 = vmul.f32 %v33, %v24
    %v38 = vmul.f32 %v36, %v24
    %v39 = vadd.f32 %v37, 1e-06
    %v40 = vadd.f32 %v38, 1e-06
    %v41 = vrsqrt.pop %v39
    %v42 = vrsqrt.pop %v40
    %v43 = vmul.f32 %v27, %v41
    %v44 = vmul.f32 %v28, %v42
    %v45 = vld [vmem:[%s1] sm:$0x1]
    %v46 = vmul.f32 %v43, %v45
    %v47 = vmul.f32 %v44, %v45
    %v48 = vld [vmem:[%s2] sm:$0x1]
    %v49 = vadd.f32 %v46, %v48
    %v50 = vadd.f32 %v47, %v48
    %51 = vst.msk [vmem:[#allocation2] sm:$0x1] %vm17, %v49
    %52 = vst.msk [vmem:[#allocation2 + $0x1] sm:$0x1] %vm17, %v50
    // Predicated region
    $region14: #{_lambda_.7} parent=1 // pred_check
      _
    $region15: #{_lambda_.7} parent=1 // pred_check_branch
      %54 = sbr.rel (0) target = $region17
    $region16: #{_lambda_.7} parent=1 // pred_region
      %s56 = ssub.s32 32, 32
      %57 = vsyncadd [#allocation3], %s56
      %s58 = sshll.u32 [#allocation2], 4
      %s59 = int_to_ptr.vmem [resolvable:$true] %s58
      %64 = dma.vmem_to_hbm [thread:$0]  %s59, 32, %s3, [#allocation3], 16, 16, 1
    $region17: #{_lambda_.7} parent=1 // pred_fallthru
      _
    // Predicated region
    $region18: #{_lambda_.7} parent=1 // pred_check
      _
    $region19: #{_lambda_.7} parent=1 // pred_check_branch
      %66 = sbr.rel (0) target = $region21
    $region20: #{_lambda_.7} parent=1 // pred_region
      %67 = dma.done [#allocation3], 32
    $region21: #{_lambda_.7} parent=1 // pred_fallthru
      _
    %68 = vsyncpa [#allocation3], 1

// kernel: _lambda_.4
$region0: #{_lambda_.4}
  #allocation0 [shape = 'u32[]', space=smem, size = 0x4, offset = 0x4, fixed_abs, tag = 'smem constant byte address 0x4 - core index']
  #allocation1 [shape = 'u32[144,128]{1,0:T(1,128)}', space=vmem, size = 0x12000, scoped, tag = 'internal scratch']
  %s0 = inlined_call_operand.vmem [shape: bf16[2,16,64], index: 0, kind: input, shape index: {}]
  %s1 = inlined_call_operand.vmem [shape: bf16[64,32], index: 1, kind: input, shape index: {}]
  %s2 = inlined_call_operand.vmem [shape: f32[1,32], index: 2, kind: input, shape index: {}]
  %s3 = inlined_call_operand.vmem [shape: f32[1,16,32], index: 3, kind: input, shape index: {}]
  %s4 = inlined_call_operand.vmem [shape: f32[1,32], index: 4, kind: input, shape index: {}]
  %s5 = inlined_call_operand.vmem [shape: f32[2,17,32], index: 5, kind: output, shape index: {}]
  %s6 = sld [smem:[#allocation0]]
  $region53: #{_lambda_.4} parent=0
    _
  %s8 = ssub.s32 1, %s6
  %s9 = scalar_select 0, %s8, %s6
  loop: start=0, step=1, limit=4
  $region2: #{_lambda_.4} parent=0 // loop_pre_header
    _
  $region3: #{_lambda_.4} parent=0 // loop_header
    %s11 = sphi 0, %s15
    %p12 = scmp.ge.s32.totalorder %s11, 4
    %s21 = sphi 0, %s23
    %s24 = sphi 0, %s21
    %s25 = sphi 0, %s24
    %s41 = sphi 0, %s25
    %s45 = sphi 0, %s45
    %s47 = sphi 0, %s45
    %s48 = sphi 0, %s47
    %s62 = sphi 0, %s48
    %s66 = sphi 0, %s66
    %s68 = sphi 0, %s66
    %s69 = sphi 0, %s68
    %s83 = sphi 0, %s69
    %s87 = sphi 0, %s87
    %s89 = sphi 0, %s87
    %s90 = sphi 0, %s89
    %s104 = sphi 0, %s90
    %s108 = sphi 0, %s108
    %s110 = sphi 0, %s108
    %s111 = sphi 0, %s110
    %s125 = sphi 0, %s111
    %s131 = sphi 0, %s133
    %s134 = sphi 0, %s131
    %s135 = sphi 0, %s134
    %s151 = sphi 0, %s135
  $region4: #{_lambda_.4} parent=0 // loop_header_branch
    %14 = sbr.rel (%p12) target = $region8
  $region5: #{_lambda_.4} parent=0 // loop_body
    %s16 = ssub.s32 %s11, 1
    %s17 = ssub.s32 %s11, 2
    %s18 = sadd.s32 %s11, 1
    %s19 = ssub.s32 %s11, %s18
    %p20 = scmp.eq.s32.totalorder %s19, 0
    %s22 = sadd.s32 %s21, 1
    %s23 = scalar_select %p20, %s21, %s22
    %p26 = pneg %p20
    %p27 = scmp.eq.s32.totalorder %s11, 1
    %p28 = por %p26, %p27
    %p29 = scmp.ne.s32.totalorder %s21, %s24
    %p30 = scmp.eq.s32.totalorder %s11, 0
    %p31 = por %p29, %p30
    %p32 = scmp.ne.s32.totalorder %s21, %s24
    %p33 = scmp.eq.s32.totalorder %s16, 1
    %p34 = por %p32, %p33
    %p35 = scmp.ne.s32.totalorder %s24, %s25
    %p36 = scmp.eq.s32.totalorder %s16, 0
    %p37 = por %p35, %p36
    %p38 = scmp.ne.s32.totalorder %s24, %s25
    %p39 = scmp.eq.s32.totalorder %s17, 1
    %p40 = por %p38, %p39
    %p42 = scmp.ne.s32.totalorder %s25, %s41
    %p43 = scmp.eq.s32.totalorder %s17, 0
    %p44 = por %p42, %p43
    %s46 = sadd.s32 %s45, 1
    %p49 = scmp.eq.s32.totalorder %s11, 1
    %p50 = scmp.ne.s32.totalorder %s45, %s47
    %p51 = scmp.eq.s32.totalorder %s11, 0
    %p52 = por %p50, %p51
    %p53 = scmp.ne.s32.totalorder %s45, %s47
    %p54 = scmp.eq.s32.totalorder %s16, 1
    %p55 = por %p53, %p54
    %p56 = scmp.ne.s32.totalorder %s47, %s48
    %p57 = scmp.eq.s32.totalorder %s16, 0
    %p58 = por %p56, %p57
    %p59 = scmp.ne.s32.totalorder %s47, %s48
    %p60 = scmp.eq.s32.totalorder %s17, 1
    %p61 = por %p59, %p60
    %p63 = scmp.ne.s32.totalorder %s48, %s62
    %p64 = scmp.eq.s32.totalorder %s17, 0
    %p65 = por %p63, %p64
    %s67 = sadd.s32 %s66, 1
    %p70 = scmp.eq.s32.totalorder %s11, 1
    %p71 = scmp.ne.s32.totalorder %s66, %s68
    %p72 = scmp.eq.s32.totalorder %s11, 0
    %p73 = por %p71, %p72
    %p74 = scmp.ne.s32.totalorder %s66, %s68
    %p75 = scmp.eq.s32.totalorder %s16, 1
    %p76 = por %p74, %p75
    %p77 = scmp.ne.s32.totalorder %s68, %s69
    %p78 = scmp.eq.s32.totalorder %s16, 0
    %p79 = por %p77, %p78
    %p80 = scmp.ne.s32.totalorder %s68, %s69
    %p81 = scmp.eq.s32.totalorder %s17, 1
    %p82 = por %p80, %p81
    %p84 = scmp.ne.s32.totalorder %s69, %s83
    %p85 = scmp.eq.s32.totalorder %s17, 0
    %p86 = por %p84, %p85
    %s88 = sadd.s32 %s87, 1
    %p91 = scmp.eq.s32.totalorder %s11, 1
    %p92 = scmp.ne.s32.totalorder %s87, %s89
    %p93 = scmp.eq.s32.totalorder %s11, 0
    %p94 = por %p92, %p93
    %p95 = scmp.ne.s32.totalorder %s87, %s89
    %p96 = scmp.eq.s32.totalorder %s16, 1
    %p97 = por %p95, %p96
    %p98 = scmp.ne.s32.totalorder %s89, %s90
    %p99 = scmp.eq.s32.totalorder %s16, 0
    %p100 = por %p98, %p99
    %p101 = scmp.ne.s32.totalorder %s89, %s90
    %p102 = scmp.eq.s32.totalorder %s17, 1
    %p103 = por %p101, %p102
    %p105 = scmp.ne.s32.totalorder %s90, %s104
    %p106 = scmp.eq.s32.totalorder %s17, 0
    %p107 = por %p105, %p106
    %s109 = sadd.s32 %s108, 1
    %p112 = scmp.eq.s32.totalorder %s11, 1
    %p113 = scmp.ne.s32.totalorder %s108, %s110
    %p114 = scmp.eq.s32.totalorder %s11, 0
    %p115 = por %p113, %p114
    %p116 = scmp.ne.s32.totalorder %s108, %s110
    %p117 = scmp.eq.s32.totalorder %s16, 1
    %p118 = por %p116, %p117
    %p119 = scmp.ne.s32.totalorder %s110, %s111
    %p120 = scmp.eq.s32.totalorder %s16, 0
    %p121 = por %p119, %p120
    %p122 = scmp.ne.s32.totalorder %s110, %s111
    %p123 = scmp.eq.s32.totalorder %s17, 1
    %p124 = por %p122, %p123
    %p126 = scmp.ne.s32.totalorder %s111, %s125
    %p127 = scmp.eq.s32.totalorder %s17, 0
    %p128 = por %p126, %p127
    %s129 = ssub.s32 %s11, %s18
    %p130 = scmp.eq.s32.totalorder %s129, 0
    %s132 = sadd.s32 %s131, 1
    %s133 = scalar_select %p130, %s131, %s132
    %p136 = pneg %p130
    %p137 = scmp.eq.s32.totalorder %s11, 1
    %p138 = por %p136, %p137
    %p139 = scmp.ne.s32.totalorder %s131, %s134
    %p140 = scmp.eq.s32.totalorder %s11, 0
    %p141 = por %p139, %p140
    %p142 = scmp.ne.s32.totalorder %s131, %s134
    %p143 = scmp.eq.s32.totalorder %s16, 1
    %p144 = por %p142, %p143
    %p145 = scmp.ne.s32.totalorder %s134, %s135
    %p146 = scmp.eq.s32.totalorder %s16, 0
    %p147 = por %p145, %p146
    %p148 = scmp.ne.s32.totalorder %s134, %s135
    %p149 = scmp.eq.s32.totalorder %s17, 1
    %p150 = por %p148, %p149
    %p152 = scmp.ne.s32.totalorder %s135, %s151
    %p153 = scmp.eq.s32.totalorder %s17, 0
    %p154 = por %p152, %p153
    %p155 = scmp.le.s32.totalorder 1, %s11
    %p156 = scmp.lt.s32.totalorder %s11, 3
    %p157 = pnand %p155, %p156
    %p158 = pneg %p157
    // Predicated region
    $region9: #{_lambda_.4} parent=5 // pred_check
      _
    $region10: #{_lambda_.4} parent=5 // pred_check_branch
      %160 = sbr.rel (%p157) target = $region12
    $region11: #{_lambda_.4} parent=5 // pred_region
      %s161 = ssub.s32 %s11, 1
      // Predicated region
      $region13: #{_lambda_.4} parent=11 // pred_check
        %p162 = pneg %p58
      $region14: #{_lambda_.4} parent=11 // pred_check_branch
        %164 = sbr.rel (%p162) target = $region16
      $region15: #{_lambda_.4} parent=11 // pred_region
        _
      $region16: #{_lambda_.4} parent=11 // pred_fallthru
        _
      // Predicated region
      $region17: #{_lambda_.4} parent=11 // pred_check
        %p165 = pneg %p79
      $region18: #{_lambda_.4} parent=11 // pred_check_branch
        %167 = sbr.rel (%p165) target = $region20
      $region19: #{_lambda_.4} parent=11 // pred_region
        _
      $region20: #{_lambda_.4} parent=11 // pred_fallthru
        _
      // Predicated region
      $region21: #{_lambda_.4} parent=11 // pred_check
        %p168 = pneg %p100
      $region22: #{_lambda_.4} parent=11 // pred_check_branch
        %170 = sbr.rel (%p168) target = $region24
      $region23: #{_lambda_.4} parent=11 // pred_region
        _
      $region24: #{_lambda_.4} parent=11 // pred_fallthru
        _
      // Predicated region
      $region25: #{_lambda_.4} parent=11 // pred_check
        %p171 = pneg %p121
      $region26: #{_lambda_.4} parent=11 // pred_check_branch
        %173 = sbr.rel (%p171) target = $region28
      $region27: #{_lambda_.4} parent=11 // pred_region
        _
      $region28: #{_lambda_.4} parent=11 // pred_fallthru
        _
    $region12: #{_lambda_.4} parent=5 // pred_fallthru
      _
    %p174 = scmp.lt.s32.totalorder %s11, 2
    // Predicated region
    $region29: #{_lambda_.4} parent=5 // pred_check
      %p175 = pneg %p174
    $region30: #{_lambda_.4} parent=5 // pred_check_branch
      %177 = sbr.rel (%p175) target = $region32
    $region31: #{_lambda_.4} parent=5 // pred_region
      // Predicated region
      $region33: #{_lambda_.4} parent=31 // pred_check
        %p178 = pneg %p31
      $region34: #{_lambda_.4} parent=31 // pred_check_branch
        %180 = sbr.rel (%p178) target = $region36
      $region35: #{_lambda_.4} parent=31 // pred_region
        %p181 = scmp.lt.s32.totalorder %s11, 1
        %s182 = scalar_select %p181, %s11, 1
        %s183 = smul.addr %s182, 2
        %s184 = smul.addr %s183, 4
        %s185 = scalar_lea.vmem %s0, %s184
      $region36: #{_lambda_.4} parent=31 // pred_fallthru
        _
    $region32: #{_lambda_.4} parent=5 // pred_fallthru
      _
    %p186 = scmp.le.s32.totalorder 1, %s11
    %p187 = scmp.lt.s32.totalorder %s11, 3
    %p188 = pnand %p186, %p187
    %p189 = pneg %p188
    // Predicated region
    $region37: #{_lambda_.4} parent=5 // pred_check
      _
    $region38: #{_lambda_.4} parent=5 // pred_check_branch
      %191 = sbr.rel (%p188) target = $region40
    $region39: #{_lambda_.4} parent=5 // pred_region
      %s192 = ssub.s32 %s11, 1
      %p193 = scmp.lt.s32.totalorder %s16, 1
      %s194 = scalar_select %p193, %s16, 1
      %s195 = smul.addr %s194, 2
      %s196 = smul.addr %s195, 4
      %s197 = scalar_lea.vmem %s0, %s196
      %p198 = pneg %p37
      %p199 = pneg %p34
      %p200 = pneg %p58
      %p201 = pneg %p55
      %p202 = pneg %p79
      %p203 = pneg %p76
      %p204 = pneg %p100
      %p205 = pneg %p97
      %p206 = pneg %p121
      %p207 = pneg %p118
      %p208 = pneg %p147
      %p209 = pneg %p144
      %p210 = scmp.lt.s32.totalorder %s16, 1
      %s211 = scalar_select %p210, %s16, 1
      %s212 = smul.addr %s211, 3
      %s213 = smul.addr %s212, 8
      %s214 = scalar_lea.vmem %s5, %s213
      %p215 = scmp.lt.s32.totalorder %s16, 1
      %s216 = scalar_select %p215, %s16, 1
      %s217 = smul.addr %s216, 2
      %s218 = smul.addr %s217, 4
      %s219 = scalar_lea.vmem %s0, %s218
      %p220 = scmp.lt.s32.totalorder %s16, 1
      %s221 = scalar_select %p220, %s16, 1
      %s222 = smul.addr %s221, 3
      %s223 = smul.addr %s222, 8
      %s224 = scalar_lea.vmem %s5, %s223
      %v226 = vld [vmem:[%s219] sm:$0xf]
      %v227 = vld [vmem:[%s219 + $0x4] sm:$0xf]
      %v228 = vld [vmem:[%s1] sm:$0xf]
      %v229 = vld [vmem:[%s1 + $0x4] sm:$0xf]
      %v230 = vld [vmem:[%s1 + $0x8] sm:$0xf]
      %v231 = vld [vmem:[%s1 + $0xc] sm:$0xf]
      %v232 = vld [vmem:[%s1 + $0x10] sm:$0xf]
      %v233 = vld [vmem:[%s1 + $0x14] sm:$0xf]
      %v234 = vld [vmem:[%s1 + $0x18] sm:$0xf]
      %v235 = vld [vmem:[%s1 + $0x1c] sm:$0xf]
      %v236 = vld [vmem:[%s4] sm:$0x1]
      %vm237 = vcmask 253952
      %238 = vst.msk [vmem:[%s224] sm:$0x1] %vm237, %v236
      %v239 = vld [vmem:[%s2] sm:$0x1]
      %v241 = vlaneseq
      %v242 = vshrl.u32 %v241, 7
      %v243 = vsub.s32 0, %v242
      %v244 = vrot.slane %v239, %v243
      %v248 = vunpack.c.l.b16 %v226
      %v249 = vunpack.c.l.b16 %v227
      %v250 = vpack.c.b16 %v249, %v248
      %v259 = vunpack.c.l.b16 %v228
      %v260 = vunpack.c.l.b16 %v229
      %v261 = vunpack.c.l.b16 %v230
      %v262 = vunpack.c.l.b16 %v231
      %v263 = vunpack.c.l.b16 %v232
      %v264 = vunpack.c.l.b16 %v233
      %v265 = vunpack.c.l.b16 %v234
      %v266 = vunpack.c.l.b16 %v235
      %v267 = vpack.c.b16 %v260, %v259
      %v268 = vpack.c.b16 %v262, %v261
      %v269 = vpack.c.b16 %v264, %v263
      %v270 = vpack.c.b16 %v266, %v265
      %vm275 = vcmask 523264
      %v277 = vsel %vm275, %v250, 0
      %279 = vmatprep.subr.bf16.mxu0 0
      %280 = vmatpush1.bf16.msra.mxu0 %v267
      %281 = vmatprep.subr.bf16.mxu0 0
      %282 = vmatpush1.bf16.msra.mxu0 %v268
      %283 = vmatprep.subr.bf16.mxu0 0
      %284 = vmatpush1.bf16.msra.mxu0 %v269
      %285 = vmatprep.subr.bf16.mxu0 0
      %286 = vmatpush1.bf16.msra.mxu0 %v270
      %287 = vmatprep.subr.bf16.mxu0 0
      %288 = vmatpush1.bf16.msra.mxu0 0
      %289 = vmatprep.subr.bf16.mxu0 0
      %290 = vmatpush1.bf16.msra.mxu0 0
      %291 = vmatprep.subr.bf16.mxu0 0
      %292 = vmatpush1.bf16.msra.mxu0 0
      %293 = vmatprep.subr.bf16.mxu0 0
      %294 = vmatpush1.bf16.msra.mxu0 0
      %295 = vmatprep.subr.bf16.mxu0 0
      %296 = vmatpush1.bf16.msra.mxu0 0
      %297 = vmatprep.subr.bf16.mxu0 0
      %298 = vmatpush1.bf16.msra.mxu0 0
      %299 = vmatprep.subr.bf16.mxu0 0
      %300 = vmatpush1.bf16.msra.mxu0 0
      %301 = vmatprep.subr.bf16.mxu0 0
      %302 = vmatpush1.bf16.msra.mxu0 0
      %303 = vmatprep.subr.bf16.mxu0 0
      %304 = vmatpush1.bf16.msra.mxu0 0
      %305 = vmatprep.subr.bf16.mxu0 0
      %306 = vmatpush1.bf16.msra.mxu0 0
      %307 = vmatprep.subr.bf16.mxu0 0
      %308 = vmatpush1.bf16.msra.mxu0 0
      %309 = vmatprep.subr.bf16.mxu0 0
      %310 = vmatpush1.bf16.msra.mxu0 0
      %311 = vmatprep.mubr.bf16.mxu0 0
      %312 = vmatmul.mubr.bf16.gmra.mrb[0].mxu0 %v277
      %v313 = vpop.f32.mrb[0].mxu0
      %v314 = vadd.f32 %v244, %v313
      %v315 = vpop.f32.mrb[0].mxu0
      %v316 = vpop.f32.mrb[0].mxu0
      %v317 = vadd.f32 %v244, %v316
      %v318 = vpop.f32.mrb[0].mxu0
      %319 = vdwg.mxu0
      %v320 = vld [vmem:[%s3] sm:$0xff]
      %v321 = vld [vmem:[%s3 + $0x8] sm:$0xff]
      %v322 = vadd.f32 %v314, %v320
      %v323 = vadd.f32 %v317, %v321
      %vm324 = vcmask 261120
      %325 = vst.msk [vmem:[%s224 + $0x1] sm:$0xff] %vm324, %v322
      %326 = vst.msk [vmem:[%s224 + $0x9] sm:$0xff] %vm324, %v323
      %p327 = scmp.lt.s32.totalorder %s16, 1
      %s328 = scalar_select %p327, %s16, 1
      %s329 = smul.addr %s328, 3
      %s330 = smul.addr %s329, 8
      %s331 = scalar_lea.vmem %s5, %s330
      // Predicated region
      $region41: #{_lambda_.4} parent=39 // pred_check
        %p332 = pneg %p144
      $region42: #{_lambda_.4} parent=39 // pred_check_branch
        %334 = sbr.rel (%p332) target = $region44
      $region43: #{_lambda_.4} parent=39 // pred_region
        _
      $region44: #{_lambda_.4} parent=39 // pred_fallthru
        _
    $region40: #{_lambda_.4} parent=5 // pred_fallthru
      _
    %p335 = scmp.le.s32.totalorder 2, %s11
    // Predicated region
    $region45: #{_lambda_.4} parent=5 // pred_check
      %p336 = pneg %p335
    $region46: #{_lambda_.4} parent=5 // pred_check_branch
      %338 = sbr.rel (%p336) target = $region48
    $region47: #{_lambda_.4} parent=5 // pred_region
      %s339 = ssub.s32 %s11, 2
      // Predicated region
      $region49: #{_lambda_.4} parent=47 // pred_check
        %p340 = pneg %p150
      $region50: #{_lambda_.4} parent=47 // pred_check_branch
        %342 = sbr.rel (%p340) target = $region52
      $region51: #{_lambda_.4} parent=47 // pred_region
        %p343 = scmp.lt.s32.totalorder %s17, 1
        %s344 = scalar_select %p343, %s17, 1
        %s345 = smul.addr %s344, 3
        %s346 = smul.addr %s345, 8
        %s347 = scalar_lea.vmem %s5, %s346
      $region52: #{_lambda_.4} parent=47 // pred_fallthru
        _
    $region48: #{_lambda_.4} parent=5 // pred_fallthru
      _
  $region6: #{_lambda_.4} parent=0 // loop_footer
    %s15 = sadd.s32 1, %s11
  $region7: #{_lambda_.4} parent=0 // loop_footer_branch
    %10 = sbr.rel target = $region3
  $region8: #{_lambda_.4} parent=0 // loop_exit
    _

// kernel: _lambda_.5
$region0: #{_lambda_.5}
  #allocation0 [shape = 'u32[]', space=smem, size = 0x4, offset = 0x4, fixed_abs, tag = 'smem constant byte address 0x4 - core index']
  #allocation1 [shape = 'u32[144,128]{1,0:T(1,128)}', space=vmem, size = 0x12000, scoped, tag = 'internal scratch']
  #allocation2 [shape = 'bf16[17,32]{1,0:T(8,128)(2,1)}', space=vmem, size = 0x1800, scoped, tag = 'scratch operand']
  %s0 = inlined_call_operand.vmem [shape: f32[2,17,32], index: 0, kind: input, shape index: {}]
  %s1 = inlined_call_operand.vmem [shape: f32[1,32], index: 1, kind: input, shape index: {}]
  %s2 = inlined_call_operand.vmem [shape: f32[1,32], index: 2, kind: input, shape index: {}]
  %s3 = inlined_call_operand.vmem [shape: bf16[32,96], index: 3, kind: input, shape index: {}]
  %s4 = inlined_call_operand.vmem [shape: f32[1,96], index: 4, kind: input, shape index: {}]
  %s5 = inlined_call_operand.vmem [shape: bf16[32,32], index: 5, kind: input, shape index: {}]
  %s6 = inlined_call_operand.vmem [shape: f32[1,32], index: 6, kind: input, shape index: {}]
  %s7 = inlined_call_operand.vmem [shape: f32[1,32], index: 7, kind: input, shape index: {}]
  %s8 = inlined_call_operand.vmem [shape: f32[1,32], index: 8, kind: input, shape index: {}]
  %s9 = inlined_call_operand.vmem [shape: bf16[32,128], index: 9, kind: input, shape index: {}]
  %s10 = inlined_call_operand.vmem [shape: f32[1,128], index: 10, kind: input, shape index: {}]
  %s11 = inlined_call_operand.vmem [shape: bf16[128,32], index: 11, kind: input, shape index: {}]
  %s12 = inlined_call_operand.vmem [shape: f32[1,32], index: 12, kind: input, shape index: {}]
  %s13 = inlined_call_operand.vmem [shape: f32[2,17,32], index: 13, kind: output, shape index: {}]
  %s14 = sld [smem:[#allocation0]]
  $region85: #{_lambda_.5} parent=0
    _
  %s16 = ssub.s32 1, %s14
  %s17 = scalar_select 0, %s16, %s14
  loop: start=0, step=1, limit=4
  $region2: #{_lambda_.5} parent=0 // loop_pre_header
    _
  $region3: #{_lambda_.5} parent=0 // loop_header
    %s19 = sphi 0, %s23
    %p20 = scmp.ge.s32.totalorder %s19, 4
    %s29 = sphi 0, %s31
    %s32 = sphi 0, %s29
    %s33 = sphi 0, %s32
    %s49 = sphi 0, %s33
    %s53 = sphi 0, %s53
    %s55 = sphi 0, %s53
    %s56 = sphi 0, %s55
    %s70 = sphi 0, %s56
    %s74 = sphi 0, %s74
    %s76 = sphi 0, %s74
    %s77 = sphi 0, %s76
    %s91 = sphi 0, %s77
    %s95 = sphi 0, %s95
    %s97 = sphi 0, %s95
    %s98 = sphi 0, %s97
    %s112 = sphi 0, %s98
    %s116 = sphi 0, %s116
    %s118 = sphi 0, %s116
    %s119 = sphi 0, %s118
    %s133 = sphi 0, %s119
    %s137 = sphi 0, %s137
    %s139 = sphi 0, %s137
    %s140 = sphi 0, %s139
    %s154 = sphi 0, %s140
    %s158 = sphi 0, %s158
    %s160 = sphi 0, %s158
    %s161 = sphi 0, %s160
    %s175 = sphi 0, %s161
    %s179 = sphi 0, %s179
    %s181 = sphi 0, %s179
    %s182 = sphi 0, %s181
    %s196 = sphi 0, %s182
    %s200 = sphi 0, %s200
    %s202 = sphi 0, %s200
    %s203 = sphi 0, %s202
    %s217 = sphi 0, %s203
    %s221 = sphi 0, %s221
    %s223 = sphi 0, %s221
    %s224 = sphi 0, %s223
    %s238 = sphi 0, %s224
    %s242 = sphi 0, %s242
    %s244 = sphi 0, %s242
    %s245 = sphi 0, %s244
    %s259 = sphi 0, %s245
    %s263 = sphi 0, %s263
    %s265 = sphi 0, %s263
    %s266 = sphi 0, %s265
    %s280 = sphi 0, %s266
    %s284 = sphi 0, %s284
    %s286 = sphi 0, %s284
    %s287 = sphi 0, %s286
    %s301 = sphi 0, %s287
    %s307 = sphi 0, %s309
    %s310 = sphi 0, %s307
    %s311 = sphi 0, %s310
    %s327 = sphi 0, %s311
  $region4: #{_lambda_.5} parent=0 // loop_header_branch
    %22 = sbr.rel (%p20) target = $region8
  $region5: #{_lambda_.5} parent=0 // loop_body
    %s24 = ssub.s32 %s19, 1
    %s25 = ssub.s32 %s19, 2
    %s26 = sadd.s32 %s19, 1
    %s27 = ssub.s32 %s19, %s26
    %p28 = scmp.eq.s32.totalorder %s27, 0
    %s30 = sadd.s32 %s29, 1
    %s31 = scalar_select %p28, %s29, %s30
    %p34 = pneg %p28
    %p35 = scmp.eq.s32.totalorder %s19, 1
    %p36 = por %p34, %p35
    %p37 = scmp.ne.s32.totalorder %s29, %s32
    %p38 = scmp.eq.s32.totalorder %s19, 0
    %p39 = por %p37, %p38
    %p40 = scmp.ne.s32.totalorder %s29, %s32
    %p41 = scmp.eq.s32.totalorder %s24, 1
    %p42 = por %p40, %p41
    %p43 = scmp.ne.s32.totalorder %s32, %s33
    %p44 = scmp.eq.s32.totalorder %s24, 0
    %p45 = por %p43, %p44
    %p46 = scmp.ne.s32.totalorder %s32, %s33
    %p47 = scmp.eq.s32.totalorder %s25, 1
    %p48 = por %p46, %p47
    %p50 = scmp.ne.s32.totalorder %s33, %s49
    %p51 = scmp.eq.s32.totalorder %s25, 0
    %p52 = por %p50, %p51
    %s54 = sadd.s32 %s53, 1
    %p57 = scmp.eq.s32.totalorder %s19, 1
    %p58 = scmp.ne.s32.totalorder %s53, %s55
    %p59 = scmp.eq.s32.totalorder %s19, 0
    %p60 = por %p58, %p59
    %p61 = scmp.ne.s32.totalorder %s53, %s55
    %p62 = scmp.eq.s32.totalorder %s24, 1
    %p63 = por %p61, %p62
    %p64 = scmp.ne.s32.totalorder %s55, %s56
    %p65 = scmp.eq.s32.totalorder %s24, 0
    %p66 = por %p64, %p65
    %p67 = scmp.ne.s32.totalorder %s55, %s56
    %p68 = scmp.eq.s32.totalorder %s25, 1
    %p69 = por %p67, %p68
    %p71 = scmp.ne.s32.totalorder %s56, %s70
    %p72 = scmp.eq.s32.totalorder %s25, 0
    %p73 = por %p71, %p72
    %s75 = sadd.s32 %s74, 1
    %p78 = scmp.eq.s32.totalorder %s19, 1
    %p79 = scmp.ne.s32.totalorder %s74, %s76
    %p80 = scmp.eq.s32.totalorder %s19, 0
    %p81 = por %p79, %p80
    %p82 = scmp.ne.s32.totalorder %s74, %s76
    %p83 = scmp.eq.s32.totalorder %s24, 1
    %p84 = por %p82, %p83
    %p85 = scmp.ne.s32.totalorder %s76, %s77
    %p86 = scmp.eq.s32.totalorder %s24, 0
    %p87 = por %p85, %p86
    %p88 = scmp.ne.s32.totalorder %s76, %s77
    %p89 = scmp.eq.s32.totalorder %s25, 1
    %p90 = por %p88, %p89
    %p92 = scmp.ne.s32.totalorder %s77, %s91
    %p93 = scmp.eq.s32.totalorder %s25, 0
    %p94 = por %p92, %p93
    %s96 = sadd.s32 %s95, 1
    %p99 = scmp.eq.s32.totalorder %s19, 1
    %p100 = scmp.ne.s32.totalorder %s95, %s97
    %p101 = scmp.eq.s32.totalorder %s19, 0
    %p102 = por %p100, %p101
    %p103 = scmp.ne.s32.totalorder %s95, %s97
    %p104 = scmp.eq.s32.totalorder %s24, 1
    %p105 = por %p103, %p104
    %p106 = scmp.ne.s32.totalorder %s97, %s98
    %p107 = scmp.eq.s32.totalorder %s24, 0
    %p108 = por %p106, %p107
    %p109 = scmp.ne.s32.totalorder %s97, %s98
    %p110 = scmp.eq.s32.totalorder %s25, 1
    %p111 = por %p109, %p110
    %p113 = scmp.ne.s32.totalorder %s98, %s112
    %p114 = scmp.eq.s32.totalorder %s25, 0
    %p115 = por %p113, %p114
    %s117 = sadd.s32 %s116, 1
    %p120 = scmp.eq.s32.totalorder %s19, 1
    %p121 = scmp.ne.s32.totalorder %s116, %s118
    %p122 = scmp.eq.s32.totalorder %s19, 0
    %p123 = por %p121, %p122
    %p124 = scmp.ne.s32.totalorder %s116, %s118
    %p125 = scmp.eq.s32.totalorder %s24, 1
    %p126 = por %p124, %p125
    %p127 = scmp.ne.s32.totalorder %s118, %s119
    %p128 = scmp.eq.s32.totalorder %s24, 0
    %p129 = por %p127, %p128
    %p130 = scmp.ne.s32.totalorder %s118, %s119
    %p131 = scmp.eq.s32.totalorder %s25, 1
    %p132 = por %p130, %p131
    %p134 = scmp.ne.s32.totalorder %s119, %s133
    %p135 = scmp.eq.s32.totalorder %s25, 0
    %p136 = por %p134, %p135
    %s138 = sadd.s32 %s137, 1
    %p141 = scmp.eq.s32.totalorder %s19, 1
    %p142 = scmp.ne.s32.totalorder %s137, %s139
    %p143 = scmp.eq.s32.totalorder %s19, 0
    %p144 = por %p142, %p143
    %p145 = scmp.ne.s32.totalorder %s137, %s139
    %p146 = scmp.eq.s32.totalorder %s24, 1
    %p147 = por %p145, %p146
    %p148 = scmp.ne.s32.totalorder %s139, %s140
    %p149 = scmp.eq.s32.totalorder %s24, 0
    %p150 = por %p148, %p149
    %p151 = scmp.ne.s32.totalorder %s139, %s140
    %p152 = scmp.eq.s32.totalorder %s25, 1
    %p153 = por %p151, %p152
    %p155 = scmp.ne.s32.totalorder %s140, %s154
    %p156 = scmp.eq.s32.totalorder %s25, 0
    %p157 = por %p155, %p156
    %s159 = sadd.s32 %s158, 1
    %p162 = scmp.eq.s32.totalorder %s19, 1
    %p163 = scmp.ne.s32.totalorder %s158, %s160
    %p164 = scmp.eq.s32.totalorder %s19, 0
    %p165 = por %p163, %p164
    %p166 = scmp.ne.s32.totalorder %s158, %s160
    %p167 = scmp.eq.s32.totalorder %s24, 1
    %p168 = por %p166, %p167
    %p169 = scmp.ne.s32.totalorder %s160, %s161
    %p170 = scmp.eq.s32.totalorder %s24, 0
    %p171 = por %p169, %p170
    %p172 = scmp.ne.s32.totalorder %s160, %s161
    %p173 = scmp.eq.s32.totalorder %s25, 1
    %p174 = por %p172, %p173
    %p176 = scmp.ne.s32.totalorder %s161, %s175
    %p177 = scmp.eq.s32.totalorder %s25, 0
    %p178 = por %p176, %p177
    %s180 = sadd.s32 %s179, 1
    %p183 = scmp.eq.s32.totalorder %s19, 1
    %p184 = scmp.ne.s32.totalorder %s179, %s181
    %p185 = scmp.eq.s32.totalorder %s19, 0
    %p186 = por %p184, %p185
    %p187 = scmp.ne.s32.totalorder %s179, %s181
    %p188 = scmp.eq.s32.totalorder %s24, 1
    %p189 = por %p187, %p188
    %p190 = scmp.ne.s32.totalorder %s181, %s182
    %p191 = scmp.eq.s32.totalorder %s24, 0
    %p192 = por %p190, %p191
    %p193 = scmp.ne.s32.totalorder %s181, %s182
    %p194 = scmp.eq.s32.totalorder %s25, 1
    %p195 = por %p193, %p194
    %p197 = scmp.ne.s32.totalorder %s182, %s196
    %p198 = scmp.eq.s32.totalorder %s25, 0
    %p199 = por %p197, %p198
    %s201 = sadd.s32 %s200, 1
    %p204 = scmp.eq.s32.totalorder %s19, 1
    %p205 = scmp.ne.s32.totalorder %s200, %s202
    %p206 = scmp.eq.s32.totalorder %s19, 0
    %p207 = por %p205, %p206
    %p208 = scmp.ne.s32.totalorder %s200, %s202
    %p209 = scmp.eq.s32.totalorder %s24, 1
    %p210 = por %p208, %p209
    %p211 = scmp.ne.s32.totalorder %s202, %s203
    %p212 = scmp.eq.s32.totalorder %s24, 0
    %p213 = por %p211, %p212
    %p214 = scmp.ne.s32.totalorder %s202, %s203
    %p215 = scmp.eq.s32.totalorder %s25, 1
    %p216 = por %p214, %p215
    %p218 = scmp.ne.s32.totalorder %s203, %s217
    %p219 = scmp.eq.s32.totalorder %s25, 0
    %p220 = por %p218, %p219
    %s222 = sadd.s32 %s221, 1
    %p225 = scmp.eq.s32.totalorder %s19, 1
    %p226 = scmp.ne.s32.totalorder %s221, %s223
    %p227 = scmp.eq.s32.totalorder %s19, 0
    %p228 = por %p226, %p227
    %p229 = scmp.ne.s32.totalorder %s221, %s223
    %p230 = scmp.eq.s32.totalorder %s24, 1
    %p231 = por %p229, %p230
    %p232 = scmp.ne.s32.totalorder %s223, %s224
    %p233 = scmp.eq.s32.totalorder %s24, 0
    %p234 = por %p232, %p233
    %p235 = scmp.ne.s32.totalorder %s223, %s224
    %p236 = scmp.eq.s32.totalorder %s25, 1
    %p237 = por %p235, %p236
    %p239 = scmp.ne.s32.totalorder %s224, %s238
    %p240 = scmp.eq.s32.totalorder %s25, 0
    %p241 = por %p239, %p240
    %s243 = sadd.s32 %s242, 1
    %p246 = scmp.eq.s32.totalorder %s19, 1
    %p247 = scmp.ne.s32.totalorder %s242, %s244
    %p248 = scmp.eq.s32.totalorder %s19, 0
    %p249 = por %p247, %p248
    %p250 = scmp.ne.s32.totalorder %s242, %s244
    %p251 = scmp.eq.s32.totalorder %s24, 1
    %p252 = por %p250, %p251
    %p253 = scmp.ne.s32.totalorder %s244, %s245
    %p254 = scmp.eq.s32.totalorder %s24, 0
    %p255 = por %p253, %p254
    %p256 = scmp.ne.s32.totalorder %s244, %s245
    %p257 = scmp.eq.s32.totalorder %s25, 1
    %p258 = por %p256, %p257
    %p260 = scmp.ne.s32.totalorder %s245, %s259
    %p261 = scmp.eq.s32.totalorder %s25, 0
    %p262 = por %p260, %p261
    %s264 = sadd.s32 %s263, 1
    %p267 = scmp.eq.s32.totalorder %s19, 1
    %p268 = scmp.ne.s32.totalorder %s263, %s265
    %p269 = scmp.eq.s32.totalorder %s19, 0
    %p270 = por %p268, %p269
    %p271 = scmp.ne.s32.totalorder %s263, %s265
    %p272 = scmp.eq.s32.totalorder %s24, 1
    %p273 = por %p271, %p272
    %p274 = scmp.ne.s32.totalorder %s265, %s266
    %p275 = scmp.eq.s32.totalorder %s24, 0
    %p276 = por %p274, %p275
    %p277 = scmp.ne.s32.totalorder %s265, %s266
    %p278 = scmp.eq.s32.totalorder %s25, 1
    %p279 = por %p277, %p278
    %p281 = scmp.ne.s32.totalorder %s266, %s280
    %p282 = scmp.eq.s32.totalorder %s25, 0
    %p283 = por %p281, %p282
    %s285 = sadd.s32 %s284, 1
    %p288 = scmp.eq.s32.totalorder %s19, 1
    %p289 = scmp.ne.s32.totalorder %s284, %s286
    %p290 = scmp.eq.s32.totalorder %s19, 0
    %p291 = por %p289, %p290
    %p292 = scmp.ne.s32.totalorder %s284, %s286
    %p293 = scmp.eq.s32.totalorder %s24, 1
    %p294 = por %p292, %p293
    %p295 = scmp.ne.s32.totalorder %s286, %s287
    %p296 = scmp.eq.s32.totalorder %s24, 0
    %p297 = por %p295, %p296
    %p298 = scmp.ne.s32.totalorder %s286, %s287
    %p299 = scmp.eq.s32.totalorder %s25, 1
    %p300 = por %p298, %p299
    %p302 = scmp.ne.s32.totalorder %s287, %s301
    %p303 = scmp.eq.s32.totalorder %s25, 0
    %p304 = por %p302, %p303
    %s305 = ssub.s32 %s19, %s26
    %p306 = scmp.eq.s32.totalorder %s305, 0
    %s308 = sadd.s32 %s307, 1
    %s309 = scalar_select %p306, %s307, %s308
    %p312 = pneg %p306
    %p313 = scmp.eq.s32.totalorder %s19, 1
    %p314 = por %p312, %p313
    %p315 = scmp.ne.s32.totalorder %s307, %s310
    %p316 = scmp.eq.s32.totalorder %s19, 0
    %p317 = por %p315, %p316
    %p318 = scmp.ne.s32.totalorder %s307, %s310
    %p319 = scmp.eq.s32.totalorder %s24, 1
    %p320 = por %p318, %p319
    %p321 = scmp.ne.s32.totalorder %s310, %s311
    %p322 = scmp.eq.s32.totalorder %s24, 0
    %p323 = por %p321, %p322
    %p324 = scmp.ne.s32.totalorder %s310, %s311
    %p325 = scmp.eq.s32.totalorder %s25, 1
    %p326 = por %p324, %p325
    %p328 = scmp.ne.s32.totalorder %s311, %s327
    %p329 = scmp.eq.s32.totalorder %s25, 0
    %p330 = por %p328, %p329
    %p331 = scmp.le.s32.totalorder 1, %s19
    %p332 = scmp.lt.s32.totalorder %s19, 3
    %p333 = pnand %p331, %p332
    %p334 = pneg %p333
    // Predicated region
    $region9: #{_lambda_.5} parent=5 // pred_check
      _
    $region10: #{_lambda_.5} parent=5 // pred_check_branch
      %336 = sbr.rel (%p333) target = $region12
    $region11: #{_lambda_.5} parent=5 // pred_region
      %s337 = ssub.s32 %s19, 1
      // Predicated region
      $region13: #{_lambda_.5} parent=11 // pred_check
        %p338 = pneg %p66
      $region14: #{_lambda_.5} parent=11 // pred_check_branch
        %340 = sbr.rel (%p338) target = $region16
      $region15: #{_lambda_.5} parent=11 // pred_region
        _
      $region16: #{_lambda_.5} parent=11 // pred_fallthru
        _
      // Predicated region
      $region17: #{_lambda_.5} parent=11 // pred_check
        %p341 = pneg %p87
      $region18: #{_lambda_.5} parent=11 // pred_check_branch
        %343 = sbr.rel (%p341) target = $region20
      $region19: #{_lambda_.5} parent=11 // pred_region
        _
      $region20: #{_lambda_.5} parent=11 // pred_fallthru
        _
      // Predicated region
      $region21: #{_lambda_.5} parent=11 // pred_check
        %p344 = pneg %p108
      $region22: #{_lambda_.5} parent=11 // pred_check_branch
        %346 = sbr.rel (%p344) target = $region24
      $region23: #{_lambda_.5} parent=11 // pred_region
        _
      $region24: #{_lambda_.5} parent=11 // pred_fallthru
        _
      // Predicated region
      $region25: #{_lambda_.5} parent=11 // pred_check
        %p347 = pneg %p129
      $region26: #{_lambda_.5} parent=11 // pred_check_branch
        %349 = sbr.rel (%p347) target = $region28
      $region27: #{_lambda_.5} parent=11 // pred_region
        _
      $region28: #{_lambda_.5} parent=11 // pred_fallthru
        _
      // Predicated region
      $region29: #{_lambda_.5} parent=11 // pred_check
        %p350 = pneg %p150
      $region30: #{_lambda_.5} parent=11 // pred_check_branch
        %352 = sbr.rel (%p350) target = $region32
      $region31: #{_lambda_.5} parent=11 // pred_region
        _
      $region32: #{_lambda_.5} parent=11 // pred_fallthru
        _
      // Predicated region
      $region33: #{_lambda_.5} parent=11 // pred_check
        %p353 = pneg %p171
      $region34: #{_lambda_.5} parent=11 // pred_check_branch
        %355 = sbr.rel (%p353) target = $region36
      $region35: #{_lambda_.5} parent=11 // pred_region
        _
      $region36: #{_lambda_.5} parent=11 // pred_fallthru
        _
      // Predicated region
      $region37: #{_lambda_.5} parent=11 // pred_check
        %p356 = pneg %p192
      $region38: #{_lambda_.5} parent=11 // pred_check_branch
        %358 = sbr.rel (%p356) target = $region40
      $region39: #{_lambda_.5} parent=11 // pred_region
        _
      $region40: #{_lambda_.5} parent=11 // pred_fallthru
        _
      // Predicated region
      $region41: #{_lambda_.5} parent=11 // pred_check
        %p359 = pneg %p213
      $region42: #{_lambda_.5} parent=11 // pred_check_branch
        %361 = sbr.rel (%p359) target = $region44
      $region43: #{_lambda_.5} parent=11 // pred_region
        _
      $region44: #{_lambda_.5} parent=11 // pred_fallthru
        _
      // Predicated region
      $region45: #{_lambda_.5} parent=11 // pred_check
        %p362 = pneg %p234
      $region46: #{_lambda_.5} parent=11 // pred_check_branch
        %364 = sbr.rel (%p362) target = $region48
      $region47: #{_lambda_.5} parent=11 // pred_region
        _
      $region48: #{_lambda_.5} parent=11 // pred_fallthru
        _
      // Predicated region
      $region49: #{_lambda_.5} parent=11 // pred_check
        %p365 = pneg %p255
      $region50: #{_lambda_.5} parent=11 // pred_check_branch
        %367 = sbr.rel (%p365) target = $region52
      $region51: #{_lambda_.5} parent=11 // pred_region
        _
      $region52: #{_lambda_.5} parent=11 // pred_fallthru
        _
      // Predicated region
      $region53: #{_lambda_.5} parent=11 // pred_check
        %p368 = pneg %p276
      $region54: #{_lambda_.5} parent=11 // pred_check_branch
        %370 = sbr.rel (%p368) target = $region56
      $region55: #{_lambda_.5} parent=11 // pred_region
        _
      $region56: #{_lambda_.5} parent=11 // pred_fallthru
        _
      // Predicated region
      $region57: #{_lambda_.5} parent=11 // pred_check
        %p371 = pneg %p297
      $region58: #{_lambda_.5} parent=11 // pred_check_branch
        %373 = sbr.rel (%p371) target = $region60
      $region59: #{_lambda_.5} parent=11 // pred_region
        _
      $region60: #{_lambda_.5} parent=11 // pred_fallthru
        _
    $region12: #{_lambda_.5} parent=5 // pred_fallthru
      _
    %p374 = scmp.lt.s32.totalorder %s19, 2
    // Predicated region
    $region61: #{_lambda_.5} parent=5 // pred_check
      %p375 = pneg %p374
    $region62: #{_lambda_.5} parent=5 // pred_check_branch
      %377 = sbr.rel (%p375) target = $region64
    $region63: #{_lambda_.5} parent=5 // pred_region
      // Predicated region
      $region65: #{_lambda_.5} parent=63 // pred_check
        %p378 = pneg %p39
      $region66: #{_lambda_.5} parent=63 // pred_check_branch
        %380 = sbr.rel (%p378) target = $region68
      $region67: #{_lambda_.5} parent=63 // pred_region
        %p381 = scmp.lt.s32.totalorder %s19, 1
        %s382 = scalar_select %p381, %s19, 1
        %s383 = smul.addr %s382, 3
        %s384 = smul.addr %s383, 8
        %s385 = scalar_lea.vmem %s0, %s384
      $region68: #{_lambda_.5} parent=63 // pred_fallthru
        _
    $region64: #{_lambda_.5} parent=5 // pred_fallthru
      _
    %p386 = scmp.le.s32.totalorder 1, %s19
    %p387 = scmp.lt.s32.totalorder %s19, 3
    %p388 = pnand %p386, %p387
    %p389 = pneg %p388
    // Predicated region
    $region69: #{_lambda_.5} parent=5 // pred_check
      _
    $region70: #{_lambda_.5} parent=5 // pred_check_branch
      %391 = sbr.rel (%p388) target = $region72
    $region71: #{_lambda_.5} parent=5 // pred_region
      %s392 = ssub.s32 %s19, 1
      %p393 = scmp.lt.s32.totalorder %s24, 1
      %s394 = scalar_select %p393, %s24, 1
      %s395 = smul.addr %s394, 3
      %s396 = smul.addr %s395, 8
      %s397 = scalar_lea.vmem %s0, %s396
      %p398 = pneg %p45
      %p399 = pneg %p42
      %p400 = pneg %p66
      %p401 = pneg %p63
      %p402 = pneg %p87
      %p403 = pneg %p84
      %p404 = pneg %p108
      %p405 = pneg %p105
      %p406 = pneg %p129
      %p407 = pneg %p126
      %p408 = pneg %p150
      %p409 = pneg %p147
      %p410 = pneg %p171
      %p411 = pneg %p168
      %p412 = pneg %p192
      %p413 = pneg %p189
      %p414 = pneg %p213
      %p415 = pneg %p210
      %p416 = pneg %p234
      %p417 = pneg %p231
      %p418 = pneg %p255
      %p419 = pneg %p252
      %p420 = pneg %p276
      %p421 = pneg %p273
      %p422 = pneg %p297
      %p423 = pneg %p294
      %p424 = pneg %p323
      %p425 = pneg %p320
      %p426 = scmp.lt.s32.totalorder %s24, 1
      %s427 = scalar_select %p426, %s24, 1
      %s428 = smul.addr %s427, 3
      %s429 = smul.addr %s428, 8
      %s430 = scalar_lea.vmem %s13, %s429
      %p431 = scmp.lt.s32.totalorder %s24, 1
      %s432 = scalar_select %p431, %s24, 1
      %s433 = smul.addr %s432, 3
      %s434 = smul.addr %s433, 8
      %s435 = scalar_lea.vmem %s0, %s434
      %p436 = scmp.lt.s32.totalorder %s24, 1
      %s437 = scalar_select %p436, %s24, 1
      %s438 = smul.addr %s437, 3
      %s439 = smul.addr %s438, 8
      %s440 = scalar_lea.vmem %s13, %s439
      %v442 = vld [vmem:[%s435] sm:$0xff]
      %v443 = vld [vmem:[%s435 + $0x8] sm:$0xff]
      %v444 = vld [vmem:[%s435 + $0x10] sm:$0x1]
      %vm445 = vcmask 261120
      %v446 = vsel %vm445, %v442, 0.0
      %447 = vadd.xlane.f32.xlu0 %v446
      %v448 = vpop.xlane.xlu0 %447
      %v449 = vsel %vm445, %v443, 0.0
      %450 = vadd.xlane.f32.xlu0 %v449
      %v451 = vpop.xlane.xlu0 %450
      %vm452 = vcmask 253952
      %v453 = vsel %vm452, %v444, 0.0
      %454 = vadd.xlane.f32.xlu0 %v453
      %v455 = vpop.xlane.xlu0 %454
      %v456 = vrcp.pop 32.0
      %v457 = vmul.f32 %v448, %v456
      %v458 = vmul.f32 %v451, %v456
      %v459 = vmul.f32 %v455, %v456
      %v460 = vsub.f32 %v442, %v457
      %v461 = vsub.f32 %v443, %v458
      %v462 = vsub.f32 %v444, %v459
      %v463 = vmul.f32 %v460, %v460
      %v464 = vmul.f32 %v461, %v461
      %v465 = vmul.f32 %v462, %v462
      %v466 = vsel %vm445, %v463, 0.0
      %467 = vadd.xlane.f32.xlu0 %v466
      %v468 = vpop.xlane.xlu0 %467
      %v469 = vsel %vm445, %v464, 0.0
      %470 = vadd.xlane.f32.xlu0 %v469
      %v471 = vpop.xlane.xlu0 %470
      %v472 = vsel %vm452, %v465, 0.0
      %473 = vadd.xlane.f32.xlu0 %v472
      %v474 = vpop.xlane.xlu0 %473
      %v475 = vmul.f32 %v468, %v456
      %v476 = vmul.f32 %v471, %v456
      %v477 = vmul.f32 %v474, %v456
      %v478 = vadd.f32 %v475, 1e-06
      %v479 = vadd.f32 %v476, 1e-06
      %v480 = vadd.f32 %v477, 1e-06
      %v481 = vrsqrt.pop %v478
      %v482 = vrsqrt.pop %v479
      %v483 = vrsqrt.pop %v480
      %v484 = vmul.f32 %v460, %v481
      %v485 = vmul.f32 %v461, %v482
      %v486 = vmul.f32 %v462, %v483
      %v487 = vld [vmem:[%s1] sm:$0x1]
      %v489 = vlaneseq
      %v490 = vshrl.u32 %v489, 7
      %v491 = vsub.s32 0, %v490
      %v492 = vrot.slane %v487, %v491
      %v494 = vmul.f32 %v484, %v492
      %v495 = vmul.f32 %v485, %v492
      %v496 = vmul.f32 %v486, %v492
      %v497 = vld [vmem:[%s2] sm:$0x1]
      %v499 = vlaneseq
      %v500 = vshrl.u32 %v499, 7
      %v501 = vsub.s32 0, %v500
      %v502 = vrot.slane %v497, %v501
      %v504 = vadd.f32 %v494, %v502
      %v505 = vadd.f32 %v495, %v502
      %v506 = vadd.f32 %v496, %v502
      %v507 = vpack.c.bf16 %v505, %v504
      %v508 = vpack.c.bf16 %v506, %v506
      %v509 = vld [vmem:[%s3] sm:$0xf]
      %v510 = vld [vmem:[%s3 + $0x4] sm:$0xf]
      %v511 = vld [vmem:[%s3 + $0x8] sm:$0xf]
      %v512 = vld [vmem:[%s3 + $0xc] sm:$0xf]
      %v513 = vld [vmem:[%s4] sm:$0x1]
      %v515 = vlaneseq
      %v516 = vshrl.u32 %v515, 7
      %v517 = vsub.s32 0, %v516
      %v518 = vrot.slane %v513, %v517
      %v524 = vunpack.c.l.b16 %v509
      %v525 = vunpack.c.l.b16 %v510
      %v526 = vunpack.c.l.b16 %v511
      %v527 = vunpack.c.l.b16 %v512
      %v528 = vpack.c.b16 %v525, %v524
      %v529 = vpack.c.b16 %v527, %v526
      %v533 = vsel %vm445, %v507, 0
      %v536 = vsel %vm445, %v508, 0
      %538 = vmatprep.subr.bf16.mxu0 0
      %539 = vmatpush1.bf16.msra.mxu0 %v528
      %540 = vmatprep.subr.bf16.mxu0 0
      %541 = vmatpush1.bf16.msra.mxu0 %v529
      %542 = vmatprep.subr.bf16.mxu0 0
      %543 = vmatpush1.bf16.msra.mxu0 0
      %544 = vmatprep.subr.bf16.mxu0 0
      %545 = vmatpush1.bf16.msra.mxu0 0
      %546 = vmatprep.subr.bf16.mxu0 0
      %547 = vmatpush1.bf16.msra.mxu0 0
      %548 = vmatprep.subr.bf16.mxu0 0
      %549 = vmatpush1.bf16.msra.mxu0 0
      %550 = vmatprep.subr.bf16.mxu0 0
      %551 = vmatpush1.bf16.msra.mxu0 0
      %552 = vmatprep.subr.bf16.mxu0 0
      %553 = vmatpush1.bf16.msra.mxu0 0
      %554 = vmatprep.subr.bf16.mxu0 0
      %555 = vmatpush1.bf16.msra.mxu0 0
      %556 = vmatprep.subr.bf16.mxu0 0
      %557 = vmatpush1.bf16.msra.mxu0 0
      %558 = vmatprep.subr.bf16.mxu0 0
      %559 = vmatpush1.bf16.msra.mxu0 0
      %560 = vmatprep.subr.bf16.mxu0 0
      %561 = vmatpush1.bf16.msra.mxu0 0
      %562 = vmatprep.subr.bf16.mxu0 0
      %563 = vmatpush1.bf16.msra.mxu0 0
      %564 = vmatprep.subr.bf16.mxu0 0
      %565 = vmatpush1.bf16.msra.mxu0 0
      %566 = vmatprep.subr.bf16.mxu0 0
      %567 = vmatpush1.bf16.msra.mxu0 0
      %568 = vmatprep.subr.bf16.mxu0 0
      %569 = vmatpush1.bf16.msra.mxu0 0
      %570 = vmatprep.mubr.bf16.mxu0 0
      %571 = vmatmul.mubr.bf16.gmra.mrb[0].mxu0 %v533
      %v572 = vpop.f32.mrb[0].mxu0
      %v573 = vadd.f32 %v518, %v572
      %v574 = vpop.f32.mrb[0].mxu0
      %v575 = vpop.f32.mrb[0].mxu0
      %v576 = vadd.f32 %v518, %v575
      %v577 = vpop.f32.mrb[0].mxu0
      %578 = vmatprep.mubr.bf16.mxu0 0
      %579 = vmatmul.mubr.bf16.gmra.mrb[0].mxu0 %v536
      %v580 = vpop.f32.mrb[0].mxu0
      %v581 = vadd.f32 %v518, %v580
      %v582 = vpop.f32.mrb[0].mxu0
      %v583 = vpop.f32.mrb[0].mxu0
      %v584 = vpop.f32.mrb[0].mxu0
      %585 = vdwg.mxu0
      %v586 = vmul.f32 %v573, 0.35355338
      %v587 = vmul.f32 %v576, 0.35355338
      %v588 = vmul.f32 %v581, 0.35355338
      %v589 = vpack.c.bf16 %v587, %v586
      %v590 = vpack.c.bf16 %v588, %v588
      %v591 = vpack.c.bf16 %v576, %v573
      %v592 = vpack.c.bf16 %v581, %v581
      %595 = vrot.lane.b32.xlu0 %v591, 96
      %v596 = vpop.permute.xlu0 %595
      %597 = vrot.lane.b32.xlu0 %v592, 96
      %v598 = vpop.permute.xlu0 %597
      %vm599 = vcmask 64512
      %v601 = vsel %vm599, %v589, 0
      %v604 = vsel %vm599, %v590, 0
      %v607 = vsel %vm599, %v596, 0
      %v610 = vsel %vm599, %v598, 0
      %612 = vmatprep.subr.bf16.mxu0 0
      %613 = vmatpush1.bf16.xpose.msra.mxu0 %v607
      %614 = vmatprep.subr.bf16.mxu0 0
      %615 = vmatpush1.bf16.xpose.msra.mxu0 %v610
      %616 = vmatprep.subr.bf16.mxu0 0
      %617 = vmatpush1.bf16.xpose.msra.mxu0 0
      %618 = vmatprep.subr.bf16.mxu0 0
      %619 = vmatpush1.bf16.xpose.msra.mxu0 0
      %620 = vmatprep.subr.bf16.mxu0 0
      %621 = vmatpush1.bf16.xpose.msra.mxu0 0
      %622 = vmatprep.subr.bf16.mxu0 0
      %623 = vmatpush1.bf16.xpose.msra.mxu0 0
      %624 = vmatprep.subr.bf16.mxu0 0
      %625 = vmatpush1.bf16.xpose.msra.mxu0 0
      %626 = vmatprep.subr.bf16.mxu0 0
      %627 = vmatpush1.bf16.xpose.msra.mxu0 0
      %628 = vmatprep.subr.bf16.mxu0 0
      %629 = vmatpush1.bf16.xpose.msra.mxu0 0
      %630 = vmatprep.subr.bf16.mxu0 0
      %631 = vmatpush1.bf16.xpose.msra.mxu0 0
      %632 = vmatprep.subr.bf16.mxu0 0
      %633 = vmatpush1.bf16.xpose.msra.mxu0 0
      %634 = vmatprep.subr.bf16.mxu0 0
      %635 = vmatpush1.bf16.xpose.msra.mxu0 0
      %636 = vmatprep.subr.bf16.mxu0 0
      %637 = vmatpush1.bf16.xpose.msra.mxu0 0
      %638 = vmatprep.subr.bf16.mxu0 0
      %639 = vmatpush1.bf16.xpose.msra.mxu0 0
      %640 = vmatprep.subr.bf16.mxu0 0
      %641 = vmatpush1.bf16.xpose.msra.mxu0 0
      %642 = vmatprep.subr.bf16.mxu0 0
      %643 = vmatpush1.bf16.xpose.msra.mxu0 0
      %644 = vmatprep.mubr.bf16.mxu0 0
      %645 = vmatmul.mubr.bf16.gmra.mrb[0].mxu0 %v601
      %v646 = vpop.f32.mrb[0].mxu0
      %v647 = vadd.f32 0.0, %v646
      %v648 = vpop.f32.mrb[0].mxu0
      %v649 = vpop.f32.mrb[0].mxu0
      %v650 = vadd.f32 0.0, %v649
      %v651 = vpop.f32.mrb[0].mxu0
      %652 = vmatprep.mubr.bf16.mxu0 0
      %653 = vmatmul.mubr.bf16.gmra.mrb[0].mxu0 %v604
      %v654 = vpop.f32.mrb[0].mxu0
      %v655 = vadd.f32 0.0, %v654
      %v656 = vpop.f32.mrb[0].mxu0
      %v657 = vpop.f32.mrb[0].mxu0
      %v658 = vpop.f32.mrb[0].mxu0
      %659 = vdwg.mxu0
      %vm660 = vcmask 138240
      %v661 = vsel %vm660, %v647, -inf
      %662 = vmax.xlane.f32.xlu0 %v661
      %v663 = vpop.xlane.xlu0 %662
      %v664 = vsel %vm660, %v650, -inf
      %665 = vmax.xlane.f32.xlu0 %v664
      %v666 = vpop.xlane.xlu0 %665
      %vm667 = vcmask 131072
      %v668 = vsel %vm667, %v655, -inf
      %669 = vmax.xlane.f32.xlu0 %v668
      %v670 = vpop.xlane.xlu0 %669
      %v671 = vsub.f32 %v647, %v663
      %v672 = vsub.f32 %v650, %v666
      %v673 = vsub.f32 %v655, %v670
      %v674 = vmul.f32 %v671, 1.442695
      %v675 = vpow.pop %v674
      %v676 = vmul.f32 %v672, 1.442695
      %v677 = vpow.pop %v676
      %v678 = vmul.f32 %v673, 1.442695
      %v679 = vpow.pop %v678
      %v680 = vsel %vm660, %v675, 0.0
      %681 = vadd.xlane.f32.xlu0 %v680
      %v682 = vpop.xlane.xlu0 %681
      %v683 = vsel %vm660, %v677, 0.0
      %684 = vadd.xlane.f32.xlu0 %v683
      %v685 = vpop.xlane.xlu0 %684
      %v686 = vsel %vm667, %v679, 0.0
      %687 = vadd.xlane.f32.xlu0 %v686
      %v688 = vpop.xlane.xlu0 %687
      %v689 = vpack.c.bf16 %v677, %v675
      %v690 = vpack.c.bf16 %v679, %v679
      %691 = vrot.lane.b32.xlu0 %v591, 64
      %v692 = vpop.permute.xlu0 %691
      %693 = vrot.lane.b32.xlu0 %v592, 64
      %v694 = vpop.permute.xlu0 %693
      %v697 = vsel %vm660, %v689, 0
      %v700 = vsel %vm660, %v690, 0
      %vm702 = vcmask 1040384
      %v703 = vsel 0, 4294967295, 65535
      %v704 = vsel %vm702, %v703, 0
      %v706 = vand.u32 %v694, %v704
      %708 = vmatprep.subr.bf16.mxu0 0
      %709 = vmatpush1.bf16.msra.mxu0 %v692
      %710 = vmatprep.subr.bf16.mxu0 0
      %711 = vmatpush1.bf16.msra.mxu0 %v706
      %712 = vmatprep.subr.bf16.mxu0 0
      %713 = vmatpush1.bf16.msra.mxu0 0
      %714 = vmatprep.subr.bf16.mxu0 0
      %715 = vmatpush1.bf16.msra.mxu0 0
      %716 = vmatprep.subr.bf16.mxu0 0
      %717 = vmatpush1.bf16.msra.mxu0 0
      %718 = vmatprep.subr.bf16.mxu0 0
      %719 = vmatpush1.bf16.msra.mxu0 0
      %720 = vmatprep.subr.bf16.mxu0 0
      %721 = vmatpush1.bf16.msra.mxu0 0
      %722 = vmatprep.subr.bf16.mxu0 0
      %723 = vmatpush1.bf16.msra.mxu0 0
      %724 = vmatprep.subr.bf16.mxu0 0
      %725 = vmatpush1.bf16.msra.mxu0 0
      %726 = vmatprep.subr.bf16.mxu0 0
      %727 = vmatpush1.bf16.msra.mxu0 0
      %728 = vmatprep.subr.bf16.mxu0 0
      %729 = vmatpush1.bf16.msra.mxu0 0
      %730 = vmatprep.subr.bf16.mxu0 0
      %731 = vmatpush1.bf16.msra.mxu0 0
      %732 = vmatprep.subr.bf16.mxu0 0
      %733 = vmatpush1.bf16.msra.mxu0 0
      %734 = vmatprep.subr.bf16.mxu0 0
      %735 = vmatpush1.bf16.msra.mxu0 0
      %736 = vmatprep.subr.bf16.mxu0 0
      %737 = vmatpush1.bf16.msra.mxu0 0
      %738 = vmatprep.subr.bf16.mxu0 0
      %739 = vmatpush1.bf16.msra.mxu0 0
      %740 = vmatprep.mubr.bf16.mxu0 0
      %741 = vmatmul.mubr.bf16.gmra.mrb[0].mxu0 %v697
      %v742 = vpop.f32.mrb[0].mxu0
      %v743 = vadd.f32 0.0, %v742
      %v744 = vpop.f32.mrb[0].mxu0
      %v745 = vpop.f32.mrb[0].mxu0
      %v746 = vadd.f32 0.0, %v745
      %v747 = vpop.f32.mrb[0].mxu0
      %748 = vmatprep.mubr.bf16.mxu0 0
      %749 = vmatmul.mubr.bf16.gmra.mrb[0].mxu0 %v700
      %v750 = vpop.f32.mrb[0].mxu0
      %v751 = vadd.f32 0.0, %v750
      %v752 = vpop.f32.mrb[0].mxu0
      %v753 = vpop.f32.mrb[0].mxu0
      %v754 = vpop.f32.mrb[0].mxu0
      %755 = vdwg.mxu0
      %v756 = vrcp.pop %v682
      %v757 = vrcp.pop %v685
      %v758 = vrcp.pop %v688
      %v759 = vmul.f32 %v743, %v756
      %v760 = vmul.f32 %v746, %v757
      %v761 = vmul.f32 %v751, %v758
      %v762 = vpack.c.bf16 %v760, %v759
      %v763 = vpack.c.bf16 %v761, %v761
      %v766 = vunpack.c.l.b16 %v762
      %v767 = vunpack.c.h.b16 %v762
      %v768 = vunpack.c.l.b16 %v763
      %v769 = vpack.c.b16 %v766, %v766
      %v770 = vpack.c.b16 %v767, %v767
      %v771 = vpack.c.b16 %v768, %v768
      %vm775 = vcmask 60416
      %776 = vst.msk [vmem:[#allocation2] sm:$0xf] %vm775, %v769
      %777 = vst.msk [vmem:[#allocation2 + $0x4] sm:$0xf] %vm775, %v770
      %vm778 = vcmask 57344
      %vm779 = vsmask.f32 256
      %vm780 = vmand %vm778, %vm779
      %v781 = vld [vmem:[#allocation2 + $0x8] sm:$0x1]
      %v782 = vsel %vm780, %v771, %v781
      %783 = vst [vmem:[#allocation2 + $0x8] sm:$0x1] %v782
      %786 = vrot.lane.b32.xlu0 %v589, 120
      %v787 = vpop.permute.xlu0 %786
      %788 = vrot.lane.b32.xlu0 %v590, 120
      %v789 = vpop.permute.xlu0 %788
      %790 = vrot.lane.b32.xlu0 %v591, 88
      %v791 = vpop.permute.xlu0 %790
      %792 = vrot.lane.b32.xlu0 %v592, 88
      %v793 = vpop.permute.xlu0 %792
      %v795 = vsel %vm599, %v787, 0
      %v798 = vsel %vm599, %v789, 0
      %v801 = vsel %vm599, %v791, 0
      %v804 = vsel %vm599, %v793, 0
      %806 = vmatprep.subr.bf16.mxu0 0
      %807 = vmatpush1.bf16.xpose.msra.mxu0 %v801
      %808 = vmatprep.subr.bf16.mxu0 0
      %809 = vmatpush1.bf16.xpose.msra.mxu0 %v804
      %810 = vmatprep.subr.bf16.mxu0 0
      %811 = vmatpush1.bf16.xpose.msra.mxu0 0
      %812 = vmatprep.subr.bf16.mxu0 0
      %813 = vmatpush1.bf16.xpose.msra.mxu0 0
      %814 = vmatprep.subr.bf16.mxu0 0
      %815 = vmatpush1.bf16.xpose.msra.mxu0 0
      %816 = vmatprep.subr.bf16.mxu0 0
      %817 = vmatpush1.bf16.xpose.msra.mxu0 0
      %818 = vmatprep.subr.bf16.mxu0 0
      %819 = vmatpush1.bf16.xpose.msra.mxu0 0
      %820 = vmatprep.subr.bf16.mxu0 0
      %821 = vmatpush1.bf16.xpose.msra.mxu0 0
      %822 = vmatprep.subr.bf16.mxu0 0
      %823 = vmatpush1.bf16.xpose.msra.mxu0 0
      %824 = vmatprep.subr.bf16.mxu0 0
      %825 = vmatpush1.bf16.xpose.msra.mxu0 0
      %826 = vmatprep.subr.bf16.mxu0 0
      %827 = vmatpush1.bf16.xpose.msra.mxu0 0
      %828 = vmatprep.subr.bf16.mxu0 0
      %829 = vmatpush1.bf16.xpose.msra.mxu0 0
      %830 = vmatprep.subr.bf16.mxu0 0
      %831 = vmatpush1.bf16.xpose.msra.mxu0 0
      %832 = vmatprep.subr.bf16.mxu0 0
      %833 = vmatpush1.bf16.xpose.msra.mxu0 0
      %834 = vmatprep.subr.bf16.mxu0 0
      %835 = vmatpush1.bf16.xpose.msra.mxu0 0
      %836 = vmatprep.subr.bf16.mxu0 0
      %837 = vmatpush1.bf16.xpose.msra.mxu0 0
      %838 = vmatprep.mubr.bf16.mxu0 0
      %839 = vmatmul.mubr.bf16.gmra.mrb[0].mxu0 %v795
      %v840 = vpop.f32.mrb[0].mxu0
      %v841 = vadd.f32 0.0, %v840
      %v842 = vpop.f32.mrb[0].mxu0
      %v843 = vpop.f32.mrb[0].mxu0
      %v844 = vadd.f32 0.0, %v843
      %v845 = vpop.f32.mrb[0].mxu0
      %846 = vmatprep.mubr.bf16.mxu0 0
      %847 = vmatmul.mubr.bf16.gmra.mrb[0].mxu0 %v798
      %v848 = vpop.f32.mrb[0].mxu0
      %v849 = vadd.f32 0.0, %v848
      %v850 = vpop.f32.mrb[0].mxu0
      %v851 = vpop.f32.mrb[0].mxu0
      %v852 = vpop.f32.mrb[0].mxu0
      %853 = vdwg.mxu0
      %v854 = vsel %vm660, %v841, -inf
      %855 = vmax.xlane.f32.xlu0 %v854
      %v856 = vpop.xlane.xlu0 %855
      %v857 = vsel %vm660, %v844, -inf
      %858 = vmax.xlane.f32.xlu0 %v857
      %v859 = vpop.xlane.xlu0 %858
      %v860 = vsel %vm667, %v849, -inf
      %861 = vmax.xlane.f32.xlu0 %v860
      %v862 = vpop.xlane.xlu0 %861
      %v863 = vsub.f32 %v841, %v856
      %v864 = vsub.f32 %v844, %v859
      %v865 = vsub.f32 %v849, %v862
      %v866 = vmul.f32 %v863, 1.442695
      %v867 = vpow.pop %v866
      %v868 = vmul.f32 %v864, 1.442695
      %v869 = vpow.pop %v868
      %v870 = vmul.f32 %v865, 1.442695
      %v871 = vpow.pop %v870
      %v872 = vsel %vm660, %v867, 0.0
      %873 = vadd.xlane.f32.xlu0 %v872
      %v874 = vpop.xlane.xlu0 %873
      %v875 = vsel %vm660, %v869, 0.0
      %876 = vadd.xlane.f32.xlu0 %v875
      %v877 = vpop.xlane.xlu0 %876
      %v878 = vsel %vm667, %v871, 0.0
      %879 = vadd.xlane.f32.xlu0 %v878
      %v880 = vpop.xlane.xlu0 %879
      %v881 = vpack.c.bf16 %v869, %v867
      %v882 = vpack.c.bf16 %v871, %v871
      %883 = vrot.lane.b32.xlu0 %v591, 56
      %v884 = vpop.permute.xlu0 %883
      %885 = vrot.lane.b32.xlu0 %v592, 56
      %v886 = vpop.permute.xlu0 %885
      %v889 = vsel %vm660, %v881, 0
      %v892 = vsel %vm660, %v882, 0
      %v895 = vand.u32 %v886, %v704
      %897 = vmatprep.subr.bf16.mxu0 0
      %898 = vmatpush1.bf16.msra.mxu0 %v884
      %899 = vmatprep.subr.bf16.mxu0 0
      %900 = vmatpush1.bf16.msra.mxu0 %v895
      %901 = vmatprep.subr.bf16.mxu0 0
      %902 = vmatpush1.bf16.msra.mxu0 0
      %903 = vmatprep.subr.bf16.mxu0 0
      %904 = vmatpush1.bf16.msra.mxu0 0
      %905 = vmatprep.subr.bf16.mxu0 0
      %906 = vmatpush1.bf16.msra.mxu0 0
      %907 = vmatprep.subr.bf16.mxu0 0
      %908 = vmatpush1.bf16.msra.mxu0 0
      %909 = vmatprep.subr.bf16.mxu0 0
      %910 = vmatpush1.bf16.msra.mxu0 0
      %911 = vmatprep.subr.bf16.mxu0 0
      %912 = vmatpush1.bf16.msra.mxu0 0
      %913 = vmatprep.subr.bf16.mxu0 0
      %914 = vmatpush1.bf16.msra.mxu0 0
      %915 = vmatprep.subr.bf16.mxu0 0
      %916 = vmatpush1.bf16.msra.mxu0 0
      %917 = vmatprep.subr.bf16.mxu0 0
      %918 = vmatpush1.bf16.msra.mxu0 0
      %919 = vmatprep.subr.bf16.mxu0 0
      %920 = vmatpush1.bf16.msra.mxu0 0
      %921 = vmatprep.subr.bf16.mxu0 0
      %922 = vmatpush1.bf16.msra.mxu0 0
      %923 = vmatprep.subr.bf16.mxu0 0
      %924 = vmatpush1.bf16.msra.mxu0 0
      %925 = vmatprep.subr.bf16.mxu0 0
      %926 = vmatpush1.bf16.msra.mxu0 0
      %927 = vmatprep.subr.bf16.mxu0 0
      %928 = vmatpush1.bf16.msra.mxu0 0
      %929 = vmatprep.mubr.bf16.mxu0 0
      %930 = vmatmul.mubr.bf16.gmra.mrb[0].mxu0 %v889
      %v931 = vpop.f32.mrb[0].mxu0
      %v932 = vadd.f32 0.0, %v931
      %v933 = vpop.f32.mrb[0].mxu0
      %v934 = vpop.f32.mrb[0].mxu0
      %v935 = vadd.f32 0.0, %v934
      %v936 = vpop.f32.mrb[0].mxu0
      %937 = vmatprep.mubr.bf16.mxu0 0
      %938 = vmatmul.mubr.bf16.gmra.mrb[0].mxu0 %v892
      %v939 = vpop.f32.mrb[0].mxu0
      %v940 = vadd.f32 0.0, %v939
      %v941 = vpop.f32.mrb[0].mxu0
      %v942 = vpop.f32.mrb[0].mxu0
      %v943 = vpop.f32.mrb[0].mxu0
      %944 = vdwg.mxu0
      %v945 = vrcp.pop %v874
      %v946 = vrcp.pop %v877
      %v947 = vrcp.pop %v880
      %v948 = vmul.f32 %v932, %v945
      %v949 = vmul.f32 %v935, %v946
      %v950 = vmul.f32 %v940, %v947
      %v951 = vpack.c.bf16 %v949, %v948
      %v952 = vpack.c.bf16 %v950, %v950
      %v955 = vunpack.c.l.b16 %v951
      %v956 = vunpack.c.h.b16 %v951
      %v957 = vunpack.c.l.b16 %v952
      %v958 = vpack.c.b16 %v955, %v955
      %v959 = vpack.c.b16 %v956, %v956
      %v960 = vpack.c.b16 %v957, %v957
      %961 = vrot.lane.b32.xlu0 %v958, 8
      %v962 = vpop.permute.xlu0 %961
      %963 = vrot.lane.b32.xlu0 %v959, 8
      %v964 = vpop.permute.xlu0 %963
      %965 = vrot.lane.b32.xlu0 %v960, 8
      %v966 = vpop.permute.xlu0 %965
      %vm970 = vcmask 126016
      %971 = vst.msk [vmem:[#allocation2] sm:$0xf] %vm970, %v962
      %972 = vst.msk [vmem:[#allocation2 + $0x4] sm:$0xf] %vm970, %v964
      %vm973 = vcmask 122944
      %vm974 = vmand %vm973, %vm779
      %v975 = vld [vmem:[#allocation2 + $0x8] sm:$0x1]
      %v976 = vsel %vm974, %v966, %v975
      %977 = vst [vmem:[#allocation2 + $0x8] sm:$0x1] %v976
      %978 = vrot.lane.b32.xlu0 %v589, 112
      %v979 = vpop.permute.xlu0 %978
      %980 = vrot.lane.b32.xlu0 %v590, 112
      %v981 = vpop.permute.xlu0 %980
      %982 = vrot.lane.b32.xlu0 %v591, 80
      %v983 = vpop.permute.xlu0 %982
      %984 = vrot.lane.b32.xlu0 %v592, 80
      %v985 = vpop.permute.xlu0 %984
      %v987 = vsel %vm599, %v979, 0
      %v990 = vsel %vm599, %v981, 0
      %v993 = vsel %vm599, %v983, 0
      %v996 = vsel %vm599, %v985, 0
      %998 = vmatprep.subr.bf16.mxu0 0
      %999 = vmatpush1.bf16.xpose.msra.mxu0 %v993
      %1000 = vmatprep.subr.bf16.mxu0 0
      %1001 = vmatpush1.bf16.xpose.msra.mxu0 %v996
      %1002 = vmatprep.subr.bf16.mxu0 0
      %1003 = vmatpush1.bf16.xpose.msra.mxu0 0
      %1004 = vmatprep.subr.bf16.mxu0 0
      %1005 = vmatpush1.bf16.xpose.msra.mxu0 0
      %1006 = vmatprep.subr.bf16.mxu0 0
      %1007 = vmatpush1.bf16.xpose.msra.mxu0 0
      %1008 = vmatprep.subr.bf16.mxu0 0
      %1009 = vmatpush1.bf16.xpose.msra.mxu0 0
      %1010 = vmatprep.subr.bf16.mxu0 0
      %1011 = vmatpush1.bf16.xpose.msra.mxu0 0
      %1012 = vmatprep.subr.bf16.mxu0 0
      %1013 = vmatpush1.bf16.xpose.msra.mxu0 0
      %1014 = vmatprep.subr.bf16.mxu0 0
      %1015 = vmatpush1.bf16.xpose.msra.mxu0 0
      %1016 = vmatprep.subr.bf16.mxu0 0
      %1017 = vmatpush1.bf16.xpose.msra.mxu0 0
      %1018 = vmatprep.subr.bf16.mxu0 0
      %1019 = vmatpush1.bf16.xpose.msra.mxu0 0
      %1020 = vmatprep.subr.bf16.mxu0 0
      %1021 = vmatpush1.bf16.xpose.msra.mxu0 0
      %1022 = vmatprep.subr.bf16.mxu0 0
      %1023 = vmatpush1.bf16.xpose.msra.mxu0 0
      %1024 = vmatprep.subr.bf16.mxu0 0
      %1025 = vmatpush1.bf16.xpose.msra.mxu0 0
      %1026 = vmatprep.subr.bf16.mxu0 0
      %1027 = vmatpush1.bf16.xpose.msra.mxu0 0
      %1028 = vmatprep.subr.bf16.mxu0 0
      %1029 = vmatpush1.bf16.xpose.msra.mxu0 0
      %1030 = vmatprep.mubr.bf16.mxu0 0
      %1031 = vmatmul.mubr.bf16.gmra.mrb[0].mxu0 %v987
      %v1032 = vpop.f32.mrb[0].mxu0
      %v1033 = vadd.f32 0.0, %v1032
      %v1034 = vpop.f32.mrb[0].mxu0
      %v1035 = vpop.f32.mrb[0].mxu0
      %v1036 = vadd.f32 0.0, %v1035
      %v1037 = vpop.f32.mrb[0].mxu0
      %1038 = vmatprep.mubr.bf16.mxu0 0
      %1039 = vmatmul.mubr.bf16.gmra.mrb[0].mxu0 %v990
      %v1040 = vpop.f32.mrb[0].mxu0
      %v1041 = vadd.f32 0.0, %v1040
      %v1042 = vpop.f32.mrb[0].mxu0
      %v1043 = vpop.f32.mrb[0].mxu0
      %v1044 = vpop.f32.mrb[0].mxu0
      %1045 = vdwg.mxu0
      %v1046 = vsel %vm660, %v1033, -inf
      %1047 = vmax.xlane.f32.xlu0 %v1046
      %v1048 = vpop.xlane.xlu0 %1047
      %v1049 = vsel %vm660, %v1036, -inf
      %1050 = vmax.xlane.f32.xlu0 %v1049
      %v1051 = vpop.xlane.xlu0 %1050
      %v1052 = vsel %vm667, %v1041, -inf
      %1053 = vmax.xlane.f32.xlu0 %v1052
      %v1054 = vpop.xlane.xlu0 %1053
      %v1055 = vsub.f32 %v1033, %v1048
      %v1056 = vsub.f32 %v1036, %v1051
      %v1057 = vsub.f32 %v1041, %v1054
      %v1058 = vmul.f32 %v1055, 1.442695
      %v1059 = vpow.pop %v1058
      %v1060 = vmul.f32 %v1056, 1.442695
      %v1061 = vpow.pop %v1060
      %v1062 = vmul.f32 %v1057, 1.442695
      %v1063 = vpow.pop %v1062
      %v1064 = vsel %vm660, %v1059, 0.0
      %1065 = vadd.xlane.f32.xlu0 %v1064
      %v1066 = vpop.xlane.xlu0 %1065
      %v1067 = vsel %vm660, %v1061, 0.0
      %1068 = vadd.xlane.f32.xlu0 %v1067
      %v1069 = vpop.xlane.xlu0 %1068
      %v1070 = vsel %vm667, %v1063, 0.0
      %1071 = vadd.xlane.f32.xlu0 %v1070
      %v1072 = vpop.xlane.xlu0 %1071
      %v1073 = vpack.c.bf16 %v1061, %v1059
      %v1074 = vpack.c.bf16 %v1063, %v1063
      %1075 = vrot.lane.b32.xlu0 %v591, 48
      %v1076 = vpop.permute.xlu0 %1075
      %1077 = vrot.lane.b32.xlu0 %v592, 48
      %v1078 = vpop.permute.xlu0 %1077
      %v1081 = vsel %vm660, %v1073, 0
      %v1084 = vsel %vm660, %v1074, 0
      %v1087 = vand.u32 %v1078, %v704
      %1089 = vmatprep.subr.bf16.mxu0 0
      %1090 = vmatpush1.bf16.msra.mxu0 %v1076
      %1091 = vmatprep.subr.bf16.mxu0 0
      %1092 = vmatpush1.bf16.msra.mxu0 %v1087
      %1093 = vmatprep.subr.bf16.mxu0 0
      %1094 = vmatpush1.bf16.msra.mxu0 0
      %1095 = vmatprep.subr.bf16.mxu0 0
      %1096 = vmatpush1.bf16.msra.mxu0 0
      %1097 = vmatprep.subr.bf16.mxu0 0
      %1098 = vmatpush1.bf16.msra.mxu0 0
      %1099 = vmatprep.subr.bf16.mxu0 0
      %1100 = vmatpush1.bf16.msra.mxu0 0
      %1101 = vmatprep.subr.bf16.mxu0 0
      %1102 = vmatpush1.bf16.msra.mxu0 0
      %1103 = vmatprep.subr.bf16.mxu0 0
      %1104 = vmatpush1.bf16.msra.mxu0 0
      %1105 = vmatprep.subr.bf16.mxu0 0
      %1106 = vmatpush1.bf16.msra.mxu0 0
      %1107 = vmatprep.subr.bf16.mxu0 0
      %1108 = vmatpush1.bf16.msra.mxu0 0
      %1109 = vmatprep.subr.bf16.mxu0 0
      %1110 = vmatpush1.bf16.msra.mxu0 0
      %1111 = vmatprep.subr.bf16.mxu0 0
      %1112 = vmatpush1.bf16.msra.mxu0 0
      %1113 = vmatprep.subr.bf16.mxu0 0
      %1114 = vmatpush1.bf16.msra.mxu0 0
      %1115 = vmatprep.subr.bf16.mxu0 0
      %1116 = vmatpush1.bf16.msra.mxu0 0
      %1117 = vmatprep.subr.bf16.mxu0 0
      %1118 = vmatpush1.bf16.msra.mxu0 0
      %1119 = vmatprep.subr.bf16.mxu0 0
      %1120 = vmatpush1.bf16.msra.mxu0 0
      %1121 = vmatprep.mubr.bf16.mxu0 0
      %1122 = vmatmul.mubr.bf16.gmra.mrb[0].mxu0 %v1081
      %v1123 = vpop.f32.mrb[0].mxu0
      %v1124 = vadd.f32 0.0, %v1123
      %v1125 = vpop.f32.mrb[0].mxu0
      %v1126 = vpop.f32.mrb[0].mxu0
      %v1127 = vadd.f32 0.0, %v1126
      %v1128 = vpop.f32.mrb[0].mxu0
      %1129 = vmatprep.mubr.bf16.mxu0 0
      %1130 = vmatmul.mubr.bf16.gmra.mrb[0].mxu0 %v1084
      %v1131 = vpop.f32.mrb[0].mxu0
      %v1132 = vadd.f32 0.0, %v1131
      %v1133 = vpop.f32.mrb[0].mxu0
      %v1134 = vpop.f32.mrb[0].mxu0
      %v1135 = vpop.f32.mrb[0].mxu0
      %1136 = vdwg.mxu0
      %v1137 = vrcp.pop %v1066
      %v1138 = vrcp.pop %v1069
      %v1139 = vrcp.pop %v1072
      %v1140 = vmul.f32 %v1124, %v1137
      %v1141 = vmul.f32 %v1127, %v1138
      %v1142 = vmul.f32 %v1132, %v1139
      %v1143 = vpack.c.bf16 %v1141, %v1140
      %v1144 = vpack.c.bf16 %v1142, %v1142
      %v1147 = vunpack.c.l.b16 %v1143
      %v1148 = vunpack.c.h.b16 %v1143
      %v1149 = vunpack.c.l.b16 %v1144
      %v1150 = vpack.c.b16 %v1147, %v1147
      %v1151 = vpack.c.b16 %v1148, %v1148
      %v1152 = vpack.c.b16 %v1149, %v1149
      %1153 = vrot.lane.b32.xlu0 %v1150, 16
      %v1154 = vpop.permute.xlu0 %1153
      %1155 = vrot.lane.b32.xlu0 %v1151, 16
      %v1156 = vpop.permute.xlu0 %1155
      %1157 = vrot.lane.b32.xlu0 %v1152, 16
      %v1158 = vpop.permute.xlu0 %1157
      %vm1162 = vcmask 191616
      %1163 = vst.msk [vmem:[#allocation2] sm:$0xf] %vm1162, %v1154
      %1164 = vst.msk [vmem:[#allocation2 + $0x4] sm:$0xf] %vm1162, %v1156
      %vm1165 = vcmask 188544
      %vm1166 = vmand %vm1165, %vm779
      %v1167 = vld [vmem:[#allocation2 + $0x8] sm:$0x1]
      %v1168 = vsel %vm1166, %v1158, %v1167
      %1169 = vst [vmem:[#allocation2 + $0x8] sm:$0x1] %v1168
      %1170 = vrot.lane.b32.xlu0 %v589, 104
      %v1171 = vpop.permute.xlu0 %1170
      %1172 = vrot.lane.b32.xlu0 %v590, 104
      %v1173 = vpop.permute.xlu0 %1172
      %1174 = vrot.lane.b32.xlu0 %v591, 72
      %v1175 = vpop.permute.xlu0 %1174
      %1176 = vrot.lane.b32.xlu0 %v592, 72
      %v1177 = vpop.permute.xlu0 %1176
      %v1179 = vsel %vm599, %v1171, 0
      %v1182 = vsel %vm599, %v1173, 0
      %v1185 = vsel %vm599, %v1175, 0
      %v1188 = vsel %vm599, %v1177, 0
      %1190 = vmatprep.subr.bf16.mxu0 0
      %1191 = vmatpush1.bf16.xpose.msra.mxu0 %v1185
      %1192 = vmatprep.subr.bf16.mxu0 0
      %1193 = vmatpush1.bf16.xpose.msra.mxu0 %v1188
      %1194 = vmatprep.subr.bf16.mxu0 0
      %1195 = vmatpush1.bf16.xpose.msra.mxu0 0
      %1196 = vmatprep.subr.bf16.mxu0 0
      %1197 = vmatpush1.bf16.xpose.msra.mxu0 0
      %1198 = vmatprep.subr.bf16.mxu0 0
      %1199 = vmatpush1.bf16.xpose.msra.mxu0 0
      %1200 = vmatprep.subr.bf16.mxu0 0
      %1201 = vmatpush1.bf16.xpose.msra.mxu0 0
      %1202 = vmatprep.subr.bf16.mxu0 0
      %1203 = vmatpush1.bf16.xpose.msra.mxu0 0
      %1204 = vmatprep.subr.bf16.mxu0 0
      %1205 = vmatpush1.bf16.xpose.msra.mxu0 0
      %1206 = vmatprep.subr.bf16.mxu0 0
      %1207 = vmatpush1.bf16.xpose.msra.mxu0 0
      %1208 = vmatprep.subr.bf16.mxu0 0
      %1209 = vmatpush1.bf16.xpose.msra.mxu0 0
      %1210 = vmatprep.subr.bf16.mxu0 0
      %1211 = vmatpush1.bf16.xpose.msra.mxu0 0
      %1212 = vmatprep.subr.bf16.mxu0 0
      %1213 = vmatpush1.bf16.xpose.msra.mxu0 0
      %1214 = vmatprep.subr.bf16.mxu0 0
      %1215 = vmatpush1.bf16.xpose.msra.mxu0 0
      %1216 = vmatprep.subr.bf16.mxu0 0
      %1217 = vmatpush1.bf16.xpose.msra.mxu0 0
      %1218 = vmatprep.subr.bf16.mxu0 0
      %1219 = vmatpush1.bf16.xpose.msra.mxu0 0
      %1220 = vmatprep.subr.bf16.mxu0 0
      %1221 = vmatpush1.bf16.xpose.msra.mxu0 0
      %1222 = vmatprep.mubr.bf16.mxu0 0
      %1223 = vmatmul.mubr.bf16.gmra.mrb[0].mxu0 %v1179
      %v1224 = vpop.f32.mrb[0].mxu0
      %v1225 = vadd.f32 0.0, %v1224
      %v1226 = vpop.f32.mrb[0].mxu0
      %v1227 = vpop.f32.mrb[0].mxu0
      %v1228 = vadd.f32 0.0, %v1227
      %v1229 = vpop.f32.mrb[0].mxu0
      %1230 = vmatprep.mubr.bf16.mxu0 0
      %1231 = vmatmul.mubr.bf16.gmra.mrb[0].mxu0 %v1182
      %v1232 = vpop.f32.mrb[0].mxu0
      %v1233 = vadd.f32 0.0, %v1232
      %v1234 = vpop.f32.mrb[0].mxu0
      %v1235 = vpop.f32.mrb[0].mxu0
      %v1236 = vpop.f32.mrb[0].mxu0
      %1237 = vdwg.mxu0
      %v1238 = vsel %vm660, %v1225, -inf
      %1239 = vmax.xlane.f32.xlu0 %v1238
      %v1240 = vpop.xlane.xlu0 %1239
      %v1241 = vsel %vm660, %v1228, -inf
      %1242 = vmax.xlane.f32.xlu0 %v1241
      %v1243 = vpop.xlane.xlu0 %1242
      %v1244 = vsel %vm667, %v1233, -inf
      %1245 = vmax.xlane.f32.xlu0 %v1244
      %v1246 = vpop.xlane.xlu0 %1245
      %v1247 = vsub.f32 %v1225, %v1240
      %v1248 = vsub.f32 %v1228, %v1243
      %v1249 = vsub.f32 %v1233, %v1246
      %v1250 = vmul.f32 %v1247, 1.442695
      %v1251 = vpow.pop %v1250
      %v1252 = vmul.f32 %v1248, 1.442695
      %v1253 = vpow.pop %v1252
      %v1254 = vmul.f32 %v1249, 1.442695
      %v1255 = vpow.pop %v1254
      %v1256 = vsel %vm660, %v1251, 0.0
      %1257 = vadd.xlane.f32.xlu0 %v1256
      %v1258 = vpop.xlane.xlu0 %1257
      %v1259 = vsel %vm660, %v1253, 0.0
      %1260 = vadd.xlane.f32.xlu0 %v1259
      %v1261 = vpop.xlane.xlu0 %1260
      %v1262 = vsel %vm667, %v1255, 0.0
      %1263 = vadd.xlane.f32.xlu0 %v1262
      %v1264 = vpop.xlane.xlu0 %1263
      %v1265 = vpack.c.bf16 %v1253, %v1251
      %v1266 = vpack.c.bf16 %v1255, %v1255
      %1267 = vrot.lane.b32.xlu0 %v591, 40
      %v1268 = vpop.permute.xlu0 %1267
      %1269 = vrot.lane.b32.xlu0 %v592, 40
      %v1270 = vpop.permute.xlu0 %1269
      %v1273 = vsel %vm660, %v1265, 0
      %v1276 = vsel %vm660, %v1266, 0
      %v1279 = vand.u32 %v1270, %v704
      %1281 = vmatprep.subr.bf16.mxu0 0
      %1282 = vmatpush1.bf16.msra.mxu0 %v1268
      %1283 = vmatprep.subr.bf16.mxu0 0
      %1284 = vmatpush1.bf16.msra.mxu0 %v1279
      %1285 = vmatprep.subr.bf16.mxu0 0
      %1286 = vmatpush1.bf16.msra.mxu0 0
      %1287 = vmatprep.subr.bf16.mxu0 0
      %1288 = vmatpush1.bf16.msra.mxu0 0
      %1289 = vmatprep.subr.bf16.mxu0 0
      %1290 = vmatpush1.bf16.msra.mxu0 0
      %1291 = vmatprep.subr.bf16.mxu0 0
      %1292 = vmatpush1.bf16.msra.mxu0 0
      %1293 = vmatprep.subr.bf16.mxu0 0
      %1294 = vmatpush1.bf16.msra.mxu0 0
      %1295 = vmatprep.subr.bf16.mxu0 0
      %1296 = vmatpush1.bf16.msra.mxu0 0
      %1297 = vmatprep.subr.bf16.mxu0 0
      %1298 = vmatpush1.bf16.msra.mxu0 0
      %1299 = vmatprep.subr.bf16.mxu0 0
      %1300 = vmatpush1.bf16.msra.mxu0 0
      %1301 = vmatprep.subr.bf16.mxu0 0
      %1302 = vmatpush1.bf16.msra.mxu0 0
      %1303 = vmatprep.subr.bf16.mxu0 0
      %1304 = vmatpush1.bf16.msra.mxu0 0
      %1305 = vmatprep.subr.bf16.mxu0 0
      %1306 = vmatpush1.bf16.msra.mxu0 0
      %1307 = vmatprep.subr.bf16.mxu0 0
      %1308 = vmatpush1.bf16.msra.mxu0 0
      %1309 = vmatprep.subr.bf16.mxu0 0
      %1310 = vmatpush1.bf16.msra.mxu0 0
      %1311 = vmatprep.subr.bf16.mxu0 0
      %1312 = vmatpush1.bf16.msra.mxu0 0
      %1313 = vmatprep.mubr.bf16.mxu0 0
      %1314 = vmatmul.mubr.bf16.gmra.mrb[0].mxu0 %v1273
      %v1315 = vpop.f32.mrb[0].mxu0
      %v1316 = vadd.f32 0.0, %v1315
      %v1317 = vpop.f32.mrb[0].mxu0
      %v1318 = vpop.f32.mrb[0].mxu0
      %v1319 = vadd.f32 0.0, %v1318
      %v1320 = vpop.f32.mrb[0].mxu0
      %1321 = vmatprep.mubr.bf16.mxu0 0
      %1322 = vmatmul.mubr.bf16.gmra.mrb[0].mxu0 %v1276
      %v1323 = vpop.f32.mrb[0].mxu0
      %v1324 = vadd.f32 0.0, %v1323
      %v1325 = vpop.f32.mrb[0].mxu0
      %v1326 = vpop.f32.mrb[0].mxu0
      %v1327 = vpop.f32.mrb[0].mxu0
      %1328 = vdwg.mxu0
      %v1329 = vrcp.pop %v1258
      %v1330 = vrcp.pop %v1261
      %v1331 = vrcp.pop %v1264
      %v1332 = vmul.f32 %v1316, %v1329
      %v1333 = vmul.f32 %v1319, %v1330
      %v1334 = vmul.f32 %v1324, %v1331
      %v1335 = vpack.c.bf16 %v1333, %v1332
      %v1336 = vpack.c.bf16 %v1334, %v1334
      %v1339 = vunpack.c.l.b16 %v1335
      %v1340 = vunpack.c.h.b16 %v1335
      %v1341 = vunpack.c.l.b16 %v1336
      %v1342 = vpack.c.b16 %v1339, %v1339
      %v1343 = vpack.c.b16 %v1340, %v1340
      %v1344 = vpack.c.b16 %v1341, %v1341
      %1345 = vrot.lane.b32.xlu0 %v1342, 24
      %v1346 = vpop.permute.xlu0 %1345
      %1347 = vrot.lane.b32.xlu0 %v1343, 24
      %v1348 = vpop.permute.xlu0 %1347
      %1349 = vrot.lane.b32.xlu0 %v1344, 24
      %v1350 = vpop.permute.xlu0 %1349
      %vm1354 = vcmask 257216
      %1355 = vst.msk [vmem:[#allocation2] sm:$0xf] %vm1354, %v1346
      %1356 = vst.msk [vmem:[#allocation2 + $0x4] sm:$0xf] %vm1354, %v1348
      %vm1357 = vcmask 254144
      %vm1358 = vmand %vm1357, %vm779
      %v1359 = vld [vmem:[#allocation2 + $0x8] sm:$0x1]
      %v1360 = vsel %vm1358, %v1350, %v1359
      %1361 = vst [vmem:[#allocation2 + $0x8] sm:$0x1] %v1360
      %v1362 = vld [vmem:[#allocation2] sm:$0xf]
      %v1363 = vld [vmem:[#allocation2 + $0x4] sm:$0xf]
      %v1364 = vld [vmem:[#allocation2 + $0x8] sm:$0x1]
      %v1365 = vld [vmem:[%s5] sm:$0xf]
      %v1366 = vld [vmem:[%s5 + $0x4] sm:$0xf]
      %v1367 = vld [vmem:[%s5 + $0x8] sm:$0xf]
      %v1368 = vld [vmem:[%s5 + $0xc] sm:$0xf]
      %v1372 = vunpack.c.l.b16 %v1362
      %v1373 = vunpack.c.l.b16 %v1363
      %v1374 = vunpack.c.l.b16 %v1364
      %v1375 = vpack.c.b16 %v1373, %v1372
      %v1376 = vpack.c.b16 %v1374, %v1374
      %v1381 = vunpack.c.l.b16 %v1365
      %v1382 = vunpack.c.l.b16 %v1366
      %v1383 = vunpack.c.l.b16 %v1367
      %v1384 = vunpack.c.l.b16 %v1368
      %v1385 = vpack.c.b16 %v1382, %v1381
      %v1386 = vpack.c.b16 %v1384, %v1383
      %v1390 = vsel %vm445, %v1375, 0
      %v1393 = vsel %vm445, %v1376, 0
      %1395 = vmatprep.subr.bf16.mxu0 0
      %1396 = vmatpush1.bf16.msra.mxu0 %v1385
      %1397 = vmatprep.subr.bf16.mxu0 0
      %1398 = vmatpush1.bf16.msra.mxu0 %v1386
      %1399 = vmatprep.subr.bf16.mxu0 0
      %1400 = vmatpush1.bf16.msra.mxu0 0
      %1401 = vmatprep.subr.bf16.mxu0 0
      %1402 = vmatpush1.bf16.msra.mxu0 0
      %1403 = vmatprep.subr.bf16.mxu0 0
      %1404 = vmatpush1.bf16.msra.mxu0 0
      %1405 = vmatprep.subr.bf16.mxu0 0
      %1406 = vmatpush1.bf16.msra.mxu0 0
      %1407 = vmatprep.subr.bf16.mxu0 0
      %1408 = vmatpush1.bf16.msra.mxu0 0
      %1409 = vmatprep.subr.bf16.mxu0 0
      %1410 = vmatpush1.bf16.msra.mxu0 0
      %1411 = vmatprep.subr.bf16.mxu0 0
      %1412 = vmatpush1.bf16.msra.mxu0 0
      %1413 = vmatprep.subr.bf16.mxu0 0
      %1414 = vmatpush1.bf16.msra.mxu0 0
      %1415 = vmatprep.subr.bf16.mxu0 0
      %1416 = vmatpush1.bf16.msra.mxu0 0
      %1417 = vmatprep.subr.bf16.mxu0 0
      %1418 = vmatpush1.bf16.msra.mxu0 0
      %1419 = vmatprep.subr.bf16.mxu0 0
      %1420 = vmatpush1.bf16.msra.mxu0 0
      %1421 = vmatprep.subr.bf16.mxu0 0
      %1422 = vmatpush1.bf16.msra.mxu0 0
      %1423 = vmatprep.subr.bf16.mxu0 0
      %1424 = vmatpush1.bf16.msra.mxu0 0
      %1425 = vmatprep.subr.bf16.mxu0 0
      %1426 = vmatpush1.bf16.msra.mxu0 0
      %1427 = vmatprep.mubr.bf16.mxu0 0
      %1428 = vmatmul.mubr.bf16.gmra.mrb[0].mxu0 %v1390
      %v1429 = vpop.f32.mrb[0].mxu0
      %v1430 = vadd.f32 0.0, %v1429
      %v1431 = vpop.f32.mrb[0].mxu0
      %v1432 = vpop.f32.mrb[0].mxu0
      %v1433 = vadd.f32 0.0, %v1432
      %v1434 = vpop.f32.mrb[0].mxu0
      %1435 = vmatprep.mubr.bf16.mxu0 0
      %1436 = vmatmul.mubr.bf16.gmra.mrb[0].mxu0 %v1393
      %v1437 = vpop.f32.mrb[0].mxu0
      %v1438 = vadd.f32 0.0, %v1437
      %v1439 = vpop.f32.mrb[0].mxu0
      %v1440 = vpop.f32.mrb[0].mxu0
      %v1441 = vpop.f32.mrb[0].mxu0
      %1442 = vdwg.mxu0
      %v1443 = vadd.f32 %v442, %v1430
      %v1444 = vadd.f32 %v443, %v1433
      %v1445 = vadd.f32 %v444, %v1438
      %v1446 = vld [vmem:[%s6] sm:$0x1]
      %v1448 = vlaneseq
      %v1449 = vshrl.u32 %v1448, 7
      %v1450 = vsub.s32 0, %v1449
      %v1451 = vrot.slane %v1446, %v1450
      %v1453 = vadd.f32 %v1443, %v1451
      %v1454 = vadd.f32 %v1444, %v1451
      %v1455 = vadd.f32 %v1445, %v1451
      %v1456 = vsel %vm445, %v1453, 0.0
      %1457 = vadd.xlane.f32.xlu0 %v1456
      %v1458 = vpop.xlane.xlu0 %1457
      %v1459 = vsel %vm445, %v1454, 0.0
      %1460 = vadd.xlane.f32.xlu0 %v1459
      %v1461 = vpop.xlane.xlu0 %1460
      %v1462 = vsel %vm452, %v1455, 0.0
      %1463 = vadd.xlane.f32.xlu0 %v1462
      %v1464 = vpop.xlane.xlu0 %1463
      %v1465 = vmul.f32 %v1458, %v456
      %v1466 = vmul.f32 %v1461, %v456
      %v1467 = vmul.f32 %v1464, %v456
      %v1468 = vsub.f32 %v1453, %v1465
      %v1469 = vsub.f32 %v1454, %v1466
      %v1470 = vsub.f32 %v1455, %v1467
      %v1471 = vmul.f32 %v1468, %v1468
      %v1472 = vmul.f32 %v1469, %v1469
      %v1473 = vmul.f32 %v1470, %v1470
      %v1474 = vsel %vm445, %v1471, 0.0
      %1475 = vadd.xlane.f32.xlu0 %v1474
      %v1476 = vpop.xlane.xlu0 %1475
      %v1477 = vsel %vm445, %v1472, 0.0
      %1478 = vadd.xlane.f32.xlu0 %v1477
      %v1479 = vpop.xlane.xlu0 %1478
      %v1480 = vsel %vm452, %v1473, 0.0
      %1481 = vadd.xlane.f32.xlu0 %v1480
      %v1482 = vpop.xlane.xlu0 %1481
      %v1483 = vmul.f32 %v1476, %v456
      %v1484 = vmul.f32 %v1479, %v456
      %v1485 = vmul.f32 %v1482, %v456
      %v1486 = vadd.f32 %v1483, 1e-06
      %v1487 = vadd.f32 %v1484, 1e-06
      %v1488 = vadd.f32 %v1485, 1e-06
      %v1489 = vrsqrt.pop %v1486
      %v1490 = vrsqrt.pop %v1487
      %v1491 = vrsqrt.pop %v1488
      %v1492 = vmul.f32 %v1468, %v1489
      %v1493 = vmul.f32 %v1469, %v1490
      %v1494 = vmul.f32 %v1470, %v1491
      %v1495 = vld [vmem:[%s7] sm:$0x1]
      %v1497 = vlaneseq
      %v1498 = vshrl.u32 %v1497, 7
      %v1499 = vsub.s32 0, %v1498
      %v1500 = vrot.slane %v1495, %v1499
      %v1502 = vmul.f32 %v1492, %v1500
      %v1503 = vmul.f32 %v1493, %v1500
      %v1504 = vmul.f32 %v1494, %v1500
      %v1505 = vld [vmem:[%s8] sm:$0x1]
      %v1507 = vlaneseq
      %v1508 = vshrl.u32 %v1507, 7
      %v1509 = vsub.s32 0, %v1508
      %v1510 = vrot.slane %v1505, %v1509
      %v1512 = vadd.f32 %v1502, %v1510
      %v1513 = vadd.f32 %v1503, %v1510
      %v1514 = vadd.f32 %v1504, %v1510
      %v1515 = vpack.c.bf16 %v1513, %v1512
      %v1516 = vpack.c.bf16 %v1514, %v1514
      %v1517 = vld [vmem:[%s9] sm:$0xf]
      %v1518 = vld [vmem:[%s9 + $0x4] sm:$0xf]
      %v1519 = vld [vmem:[%s9 + $0x8] sm:$0xf]
      %v1520 = vld [vmem:[%s9 + $0xc] sm:$0xf]
      %v1521 = vld [vmem:[%s10] sm:$0x1]
      %v1523 = vlaneseq
      %v1524 = vshrl.u32 %v1523, 7
      %v1525 = vsub.s32 0, %v1524
      %v1526 = vrot.slane %v1521, %v1525
      %v1532 = vunpack.c.l.b16 %v1517
      %v1533 = vunpack.c.l.b16 %v1518
      %v1534 = vunpack.c.l.b16 %v1519
      %v1535 = vunpack.c.l.b16 %v1520
      %v1536 = vpack.c.b16 %v1533, %v1532
      %v1537 = vpack.c.b16 %v1535, %v1534
      %v1541 = vsel %vm445, %v1515, 0
      %v1544 = vsel %vm445, %v1516, 0
      %1546 = vmatprep.subr.bf16.mxu0 0
      %1547 = vmatpush1.bf16.msra.mxu0 %v1536
      %1548 = vmatprep.subr.bf16.mxu0 0
      %1549 = vmatpush1.bf16.msra.mxu0 %v1537
      %1550 = vmatprep.subr.bf16.mxu0 0
      %1551 = vmatpush1.bf16.msra.mxu0 0
      %1552 = vmatprep.subr.bf16.mxu0 0
      %1553 = vmatpush1.bf16.msra.mxu0 0
      %1554 = vmatprep.subr.bf16.mxu0 0
      %1555 = vmatpush1.bf16.msra.mxu0 0
      %1556 = vmatprep.subr.bf16.mxu0 0
      %1557 = vmatpush1.bf16.msra.mxu0 0
      %1558 = vmatprep.subr.bf16.mxu0 0
      %1559 = vmatpush1.bf16.msra.mxu0 0
      %1560 = vmatprep.subr.bf16.mxu0 0
      %1561 = vmatpush1.bf16.msra.mxu0 0
      %1562 = vmatprep.subr.bf16.mxu0 0
      %1563 = vmatpush1.bf16.msra.mxu0 0
      %1564 = vmatprep.subr.bf16.mxu0 0
      %1565 = vmatpush1.bf16.msra.mxu0 0
      %1566 = vmatprep.subr.bf16.mxu0 0
      %1567 = vmatpush1.bf16.msra.mxu0 0
      %1568 = vmatprep.subr.bf16.mxu0 0
      %1569 = vmatpush1.bf16.msra.mxu0 0
      %1570 = vmatprep.subr.bf16.mxu0 0
      %1571 = vmatpush1.bf16.msra.mxu0 0
      %1572 = vmatprep.subr.bf16.mxu0 0
      %1573 = vmatpush1.bf16.msra.mxu0 0
      %1574 = vmatprep.subr.bf16.mxu0 0
      %1575 = vmatpush1.bf16.msra.mxu0 0
      %1576 = vmatprep.subr.bf16.mxu0 0
      %1577 = vmatpush1.bf16.msra.mxu0 0
      %1578 = vmatprep.mubr.bf16.mxu0 0
      %1579 = vmatmul.mubr.bf16.gmra.mrb[0].mxu0 %v1541
      %v1580 = vpop.f32.mrb[0].mxu0
      %v1581 = vadd.f32 %v1526, %v1580
      %v1582 = vpop.f32.mrb[0].mxu0
      %v1583 = vpop.f32.mrb[0].mxu0
      %v1584 = vadd.f32 %v1526, %v1583
      %v1585 = vpop.f32.mrb[0].mxu0
      %1586 = vmatprep.mubr.bf16.mxu0 0
      %1587 = vmatmul.mubr.bf16.gmra.mrb[0].mxu0 %v1544
      %v1588 = vpop.f32.mrb[0].mxu0
      %v1589 = vadd.f32 %v1526, %v1588
      %v1590 = vpop.f32.mrb[0].mxu0
      %v1591 = vpop.f32.mrb[0].mxu0
      %v1592 = vpop.f32.mrb[0].mxu0
      %1593 = vdwg.mxu0
      %v1594 = vmul.f32 %v1581, 0.5
      %v1595 = vmul.f32 %v1584, 0.5
      %v1596 = vmul.f32 %v1589, 0.5
      %v1597 = vmul.f32 %v1581, 0.70710677
      %v1598 = vmul.f32 %v1584, 0.70710677
      %v1599 = vmul.f32 %v1589, 0.70710677
      %v1600 = verf.f32.pop %v1597
      %v1601 = verf.f32.pop %v1598
      %v1602 = verf.f32.pop %v1599
      %v1603 = vadd.f32 %v1600, 1.0
      %v1604 = vadd.f32 %v1601, 1.0
      %v1605 = vadd.f32 %v1602, 1.0
      %v1606 = vmul.f32 %v1594, %v1603
      %v1607 = vmul.f32 %v1595, %v1604
      %v1608 = vmul.f32 %v1596, %v1605
      %v1609 = vpack.c.bf16 %v1607, %v1606
      %v1610 = vpack.c.bf16 %v1608, %v1608
      %v1611 = vld [vmem:[%s11] sm:$0xf]
      %v1612 = vld [vmem:[%s11 + $0x4] sm:$0xf]
      %v1613 = vld [vmem:[%s11 + $0x8] sm:$0xf]
      %v1614 = vld [vmem:[%s11 + $0xc] sm:$0xf]
      %v1615 = vld [vmem:[%s11 + $0x10] sm:$0xf]
      %v1616 = vld [vmem:[%s11 + $0x14] sm:$0xf]
      %v1617 = vld [vmem:[%s11 + $0x18] sm:$0xf]
      %v1618 = vld [vmem:[%s11 + $0x1c] sm:$0xf]
      %v1619 = vld [vmem:[%s11 + $0x20] sm:$0xf]
      %v1620 = vld [vmem:[%s11 + $0x24] sm:$0xf]
      %v1621 = vld [vmem:[%s11 + $0x28] sm:$0xf]
      %v1622 = vld [vmem:[%s11 + $0x2c] sm:$0xf]
      %v1623 = vld [vmem:[%s11 + $0x30] sm:$0xf]
      %v1624 = vld [vmem:[%s11 + $0x34] sm:$0xf]
      %v1625 = vld [vmem:[%s11 + $0x38] sm:$0xf]
      %v1626 = vld [vmem:[%s11 + $0x3c] sm:$0xf]
      %v1643 = vunpack.c.l.b16 %v1611
      %v1644 = vunpack.c.l.b16 %v1612
      %v1645 = vunpack.c.l.b16 %v1613
      %v1646 = vunpack.c.l.b16 %v1614
      %v1647 = vunpack.c.l.b16 %v1615
      %v1648 = vunpack.c.l.b16 %v1616
      %v1649 = vunpack.c.l.b16 %v1617
      %v1650 = vunpack.c.l.b16 %v1618
      %v1651 = vunpack.c.l.b16 %v1619
      %v1652 = vunpack.c.l.b16 %v1620
      %v1653 = vunpack.c.l.b16 %v1621
      %v1654 = vunpack.c.l.b16 %v1622
      %v1655 = vunpack.c.l.b16 %v1623
      %v1656 = vunpack.c.l.b16 %v1624
      %v1657 = vunpack.c.l.b16 %v1625
      %v1658 = vunpack.c.l.b16 %v1626
      %v1659 = vpack.c.b16 %v1644, %v1643
      %v1660 = vpack.c.b16 %v1646, %v1645
      %v1661 = vpack.c.b16 %v1648, %v1647
      %v1662 = vpack.c.b16 %v1650, %v1649
      %v1663 = vpack.c.b16 %v1652, %v1651
      %v1664 = vpack.c.b16 %v1654, %v1653
      %v1665 = vpack.c.b16 %v1656, %v1655
      %v1666 = vpack.c.b16 %v1658, %v1657
      %1675 = vmatprep.subr.bf16.mxu0 0
      %1676 = vmatpush1.bf16.msra.mxu0 %v1659
      %1677 = vmatprep.subr.bf16.mxu0 0
      %1678 = vmatpush1.bf16.msra.mxu0 %v1660
      %1679 = vmatprep.subr.bf16.mxu0 0
      %1680 = vmatpush1.bf16.msra.mxu0 %v1661
      %1681 = vmatprep.subr.bf16.mxu0 0
      %1682 = vmatpush1.bf16.msra.mxu0 %v1662
      %1683 = vmatprep.subr.bf16.mxu0 0
      %1684 = vmatpush1.bf16.msra.mxu0 %v1663
      %1685 = vmatprep.subr.bf16.mxu0 0
      %1686 = vmatpush1.bf16.msra.mxu0 %v1664
      %1687 = vmatprep.subr.bf16.mxu0 0
      %1688 = vmatpush1.bf16.msra.mxu0 %v1665
      %1689 = vmatprep.subr.bf16.mxu0 0
      %1690 = vmatpush1.bf16.msra.mxu0 %v1666
      %1691 = vmatprep.subr.bf16.mxu0 0
      %1692 = vmatpush1.bf16.msra.mxu0 0
      %1693 = vmatprep.subr.bf16.mxu0 0
      %1694 = vmatpush1.bf16.msra.mxu0 0
      %1695 = vmatprep.subr.bf16.mxu0 0
      %1696 = vmatpush1.bf16.msra.mxu0 0
      %1697 = vmatprep.subr.bf16.mxu0 0
      %1698 = vmatpush1.bf16.msra.mxu0 0
      %1699 = vmatprep.subr.bf16.mxu0 0
      %1700 = vmatpush1.bf16.msra.mxu0 0
      %1701 = vmatprep.subr.bf16.mxu0 0
      %1702 = vmatpush1.bf16.msra.mxu0 0
      %1703 = vmatprep.subr.bf16.mxu0 0
      %1704 = vmatpush1.bf16.msra.mxu0 0
      %1705 = vmatprep.subr.bf16.mxu0 0
      %1706 = vmatpush1.bf16.msra.mxu0 0
      %1707 = vmatprep.mubr.bf16.mxu0 0
      %1708 = vmatmul.mubr.bf16.gmra.mrb[0].mxu0 %v1609
      %v1709 = vpop.f32.mrb[0].mxu0
      %v1710 = vadd.f32 0.0, %v1709
      %v1711 = vpop.f32.mrb[0].mxu0
      %v1712 = vpop.f32.mrb[0].mxu0
      %v1713 = vadd.f32 0.0, %v1712
      %v1714 = vpop.f32.mrb[0].mxu0
      %1715 = vmatprep.mubr.bf16.mxu0 0
      %1716 = vmatmul.mubr.bf16.gmra.mrb[0].mxu0 %v1610
      %v1717 = vpop.f32.mrb[0].mxu0
      %v1718 = vadd.f32 0.0, %v1717
      %v1719 = vpop.f32.mrb[0].mxu0
      %v1720 = vpop.f32.mrb[0].mxu0
      %v1721 = vpop.f32.mrb[0].mxu0
      %1722 = vdwg.mxu0
      %v1723 = vadd.f32 %v1453, %v1710
      %v1724 = vadd.f32 %v1454, %v1713
      %v1725 = vadd.f32 %v1455, %v1718
      %v1726 = vld [vmem:[%s12] sm:$0x1]
      %v1728 = vlaneseq
      %v1729 = vshrl.u32 %v1728, 7
      %v1730 = vsub.s32 0, %v1729
      %v1731 = vrot.slane %v1726, %v1730
      %v1733 = vadd.f32 %v1723, %v1731
      %v1734 = vadd.f32 %v1724, %v1731
      %v1735 = vadd.f32 %v1725, %v1731
      %1736 = vst.msk [vmem:[%s440] sm:$0xff] %vm445, %v1733
      %1737 = vst.msk [vmem:[%s440 + $0x8] sm:$0xff] %vm445, %v1734
      %1738 = vst.msk [vmem:[%s440 + $0x10] sm:$0x1] %vm452, %v1735
      %p1739 = scmp.lt.s32.totalorder %s24, 1
      %s1740 = scalar_select %p1739, %s24, 1
      %s1741 = smul.addr %s1740, 3
      %s1742 = smul.addr %s1741, 8
      %s1743 = scalar_lea.vmem %s13, %s1742
      // Predicated region
      $region73: #{_lambda_.5} parent=71 // pred_check
        %p1744 = pneg %p320
      $region74: #{_lambda_.5} parent=71 // pred_check_branch
        %1746 = sbr.rel (%p1744) target = $region76
      $region75: #{_lambda_.5} parent=71 // pred_region
        _
      $region76: #{_lambda_.5} parent=71 // pred_fallthru
        _
    $region72: #{_lambda_.5} parent=5 // pred_fallthru
      _
    %p1747 = scmp.le.s32.totalorder 2, %s19
    // Predicated region
    $region77: #{_lambda_.5} parent=5 // pred_check
      %p1748 = pneg %p1747
    $region78: #{_lambda_.5} parent=5 // pred_check_branch
      %1750 = sbr.rel (%p1748) target = $region80
    $region79: #{_lambda_.5} parent=5 // pred_region
      %s1751 = ssub.s32 %s19, 2
      // Predicated region
      $region81: #{_lambda_.5} parent=79 // pred_check
        %p1752 = pneg %p326
      $region82: #{_lambda_.5} parent=79 // pred_check_branch
        %1754 = sbr.rel (%p1752) target = $region84
      $region83: #{_lambda_.5} parent=79 // pred_region
        %p1755 = scmp.lt.s32.totalorder %s25, 1
        %s1756 = scalar_select %p1755, %s25, 1
        %s1757 = smul.addr %s1756, 3
        %s1758 = smul.addr %s1757, 8
        %s1759 = scalar_lea.vmem %s13, %s1758
      $region84: #{_lambda_.5} parent=79 // pred_fallthru
        _
    $region80: #{_lambda_.5} parent=5 // pred_fallthru
      _
  $region6: #{_lambda_.5} parent=0 // loop_footer
    %s23 = sadd.s32 1, %s19
  $region7: #{_lambda_.5} parent=0 // loop_footer_branch
    %18 = sbr.rel target = $region3
  $region8: #{_lambda_.5} parent=0 // loop_exit
    _

</llo_original>
